<compile_context>
chip_gen: v5e
topology: v5e:2x2
jax: 0.10.0
libtpu: 0.0.40
codegen_flags: <defaults>
</compile_context>

<pallas_src>
import functools
import math

import jax
import jax.numpy as jnp
from jax import lax
from jax.experimental import pallas as pl
from jax.experimental.pallas import tpu as pltpu


LANE = 128          # feature dims padded to multiples of this (lane-dense tiles)
ROW_FLOOR = 256     # fused row tile never shrinks below this (MXU fill/drain)
# TODO(synk): on v6e/v7x (256-wide MXU) padding feature dims to 256 is a small
#             extra win when dims are not already multiples of 256.


def _round_up(x, m):
    return (x + m - 1) // m * m


def _cdiv(a, b):
    return (a + b - 1) // b


def _apply_act(x, act):
    if act == "gelu":          # exact erf — matches torch.nn.functional.gelu default
        return 0.5 * x * (1.0 + lax.erf(x * (1.0 / math.sqrt(2.0))))
    if act == "gelu_tanh":     # tanh approximation (runs on the otherwise-idle EUP)
        c = math.sqrt(2.0 / math.pi)
        return 0.5 * x * (1.0 + jnp.tanh(c * (x + 0.044715 * (x * x * x))))
    if act == "silu":
        return x * jax.nn.sigmoid(x)
    if act == "relu":
        return jnp.maximum(x, 0.0)
    if act == "sigmoid":
        return jax.nn.sigmoid(x)
    return x


def _vmem_capacity_bytes():
    try:
        return int(pltpu.get_tpu_info().vmem_capacity_bytes)
    except Exception:
        return 64 * 1024 * 1024   # conservative default (v7x per-TC VMEM)


# --------------------------- fused (weights-resident) path ---------------------------

def _mlp_fused_kernel(num_hidden, act, *refs):
    # refs layout: x_ref, w_in, b_in, (w_h0, b_h0), ..., w_out, b_out, o_ref
    x_ref = refs[0]
    o_ref = refs[-1]
    w_in, b_in = refs[1], refs[2]
    w_out, b_out = refs[-3], refs[-2]
    hidden_refs = refs[3:-3]

    # MXU sees operands in their stored (bf16-friendly) dtype, accumulates in f32.
    h = jnp.dot(x_ref[...], w_in[...], preferred_element_type=jnp.float32)
    h = _apply_act(h + b_in[...].astype(jnp.float32), act)

    for li in range(num_hidden):
        w_h = hidden_refs[2 * li]
        b_h = hidden_refs[2 * li + 1]
        h = jnp.dot(h.astype(w_h.dtype), w_h[...], preferred_element_type=jnp.float32)
        h = _apply_act(h + b_h[...].astype(jnp.float32), act)

    out = jnp.dot(h.astype(w_out.dtype), w_out[...], preferred_element_type=jnp.float32)
    o_ref[...] = (out + b_out[...].astype(jnp.float32)).astype(o_ref.dtype)


# --------------------------- layer-wise fallback (P3) ---------------------------

def _linear_act_kernel(act, x_ref, w_ref, b_ref, o_ref, acc_ref):
    @pl.when(pl.program_id(2) == 0)
    def _():
        acc_ref[...] = jnp.zeros_like(acc_ref)

    acc_ref[...] += jnp.dot(x_ref[...], w_ref[...], preferred_element_type=jnp.float32)

    @pl.when(pl.program_id(2) == pl.num_programs(2) - 1)
    def _():
        r = acc_ref[...] + b_ref[...].astype(jnp.float32)
        if act is not None:
            r = _apply_act(r, act)
        o_ref[...] = r.astype(o_ref.dtype)


def _pick_tile(dim, cap):
    for t in (512, 256, 128):
        if t <= cap and dim % t == 0:
            return t
    return dim   # feature dims are always padded to LANE multiples before this


def _linear_pallas(x2d, w, b, act, out_dtype, vmem_budget_bytes, vmem_limit_bytes):
    """One Linear (+ optional activation): (M, N, K)-tiled matmul with an f32
    VMEM accumulator and a fused bias/activation epilogue at the last K step."""
    M, K = x2d.shape
    N = w.shape[1]

    tn = _pick_tile(N, 512)
    tk = _pick_tile(K, 512)
    tm = min(512, _round_up(M, 8))

    def wset(t):
        return (2 * t * tk * x2d.dtype.itemsize          # double-buffered x tiles
                + 2 * tk * tn * w.dtype.itemsize         # double-buffered w tiles
                + 2 * t * tn * jnp.dtype(out_dtype).itemsize
                + t * tn * 4                             # f32 accumulator
                + 2 * tn * 4)                            # bias tiles
    while tm > 128 and wset(tm) > vmem_budget_bytes:
        tm //= 2
    tm = max(8, _round_up(min(tm, _round_up(M, 8)), 8))

    rows_p = _round_up(M, tm)
    if rows_p != M:
        x2d = jnp.pad(x2d, ((0, rows_p - M), (0, 0)))

    out = pl.pallas_call(
        functools.partial(_linear_act_kernel, act),
        out_shape=jax.ShapeDtypeStruct((rows_p, N), out_dtype),
        grid=(rows_p // tm, N // tn, K // tk),
        in_specs=[pl.BlockSpec((tm, tk), lambda i, j, k: (i, k)),
                  pl.BlockSpec((tk, tn), lambda i, j, k: (k, j)),
                  pl.BlockSpec((1, tn), lambda i, j, k: (0, j))],
        out_specs=pl.BlockSpec((tm, tn), lambda i, j, k: (i, j)),
        scratch_shapes=[pltpu.VMEM((tm, tn), jnp.float32)],
        compiler_params=pltpu.CompilerParams(
            dimension_semantics=("parallel", "parallel", "arbitrary"),
            vmem_limit_bytes=int(vmem_limit_bytes)),
        cost_estimate=pl.CostEstimate(
            flops=2 * rows_p * N * K,
            transcendentals=rows_p * N if act is not None else 0,
            bytes_accessed=(rows_p * K * x2d.dtype.itemsize
                            + K * N * w.dtype.itemsize
                            + rows_p * N * jnp.dtype(out_dtype).itemsize)),
    )(x2d, w, b)
    return out[:M]


# --------------------------- top-level wrapper ---------------------------

def mlp_forward(x, params, act="gelu", compute_dtype=jnp.bfloat16,
                tm_max=None, vmem_budget_bytes=None, vmem_limit_bytes=None,
                force_layerwise=False):
    """Forward pass of the MLP module.

    x: [B, S, d_in]; params: {'in': (W, b), 'hidden': [(W, b), ...], 'out': (W, b)}
    with W stored as [fan_in, fan_out] and b as [1, fan_out].
    compute_dtype: dtype fed to the MXU (bf16 by default; accumulation / bias /
    activation stay in f32).  Pass jnp.float32 for exact torch parity.
    """
    B, S, d_in = x.shape
    out_dtype = x.dtype
    comp_dt = jnp.dtype(compute_dtype) if compute_dtype is not None else jnp.dtype(x.dtype)

    w_in, b_in = params["in"]
    hidden = list(params["hidden"])
    w_out, b_out = params["out"]
    d_hidden = w_in.shape[1]
    d_out = w_out.shape[1]
    n_rows = B * S
    n_hidden = len(hidden)

    # --- per-generation VMEM model (128 MiB v5e/v6e vs 64 MiB v7x) ---
    capacity = _vmem_capacity_bytes()
    if vmem_budget_bytes is None:
        vmem_budget_bytes = int(0.70 * capacity)
    if vmem_limit_bytes is None:
        vmem_limit_bytes = int(0.85 * capacity)
    vmem_limit_bytes = max(int(vmem_limit_bytes), int(vmem_budget_bytes))  # budget <= limit
    if tm_max is None:
        tm_max = 1024 if capacity >= 96 * 1024 * 1024 else 512

    # --- lane-dense zero padding (exact: padded rows/cols contribute zeros) ---
    d_in_p = _round_up(d_in, LANE)
    d_h_p = _round_up(d_hidden, LANE)
    d_out_p = _round_up(d_out, LANE)

    def pad2(a, r, c, dt):
        a = a.astype(dt)
        pr, pc = r - a.shape[0], c - a.shape[1]
        return jnp.pad(a, ((0, pr), (0, pc))) if (pr or pc) else a

    w_in_p = pad2(w_in, d_in_p, d_h_p, comp_dt)
    b_in_p = pad2(b_in, 1, d_h_p, jnp.float32)
    hidden_p = [(pad2(w, d_h_p, d_h_p, comp_dt), pad2(b, 1, d_h_p, jnp.float32))
                for (w, b) in hidden]
    w_out_p = pad2(w_out, d_h_p, d_out_p, comp_dt)
    b_out_p = pad2(b_out, 1, d_out_p, jnp.float32)

    weights_p = [w_in_p] + [w for w, _ in hidden_p] + [w_out_p]
    biases_p = [b_in_p] + [b for _, b in hidden_p] + [b_out_p]

    x2d = x.reshape(n_rows, d_in).astype(comp_dt)
    if d_in_p != d_in:
        x2d = jnp.pad(x2d, ((0, 0), (0, d_in_p - d_in)))

    # --- honest VMEM accounting for the fused path ---
    # Weights counted twice (default double buffering); pl.Buffered(1) below is
    # best-effort extra headroom, never relied upon for the fit decision.
    resident_bytes = 2 * sum(int(w.size) * w.dtype.itemsize for w in weights_p)
    resident_bytes += 2 * sum(int(b.size) * b.dtype.itemsize for b in biases_p)

    def tile_bytes(tm):
        io = 2 * tm * d_in_p * comp_dt.itemsize                  # double-buffered x tiles
        io += 2 * tm * d_out_p * jnp.dtype(out_dtype).itemsize   # double-buffered out tiles
        inter = 3 * tm * d_h_p * 4                               # f32 result + act + recast temps
        return io + inter

    def fits(tm):
        return resident_bytes + tile_bytes(tm) <= vmem_budget_bytes

    row_floor = min(ROW_FLOOR, _round_up(n_rows, 8))
    use_fused = (not force_layerwise) and fits(row_floor)

    if use_fused:
        # Largest row tile that fits, >= row_floor, >= 2 grid steps (v7x megacore),
        # tile derived from a tile count so row-padding waste stays bounded.
        min_tiles = 2 if n_rows >= 16 else 1
        n_tiles = max(min_tiles, _cdiv(n_rows, tm_max))
        while True:
            tm = min(tm_max, _round_up(_cdiv(n_rows, n_tiles), 8))
            if fits(tm) or tm <= row_floor:
                break
            n_tiles += 1
        tm = max(8, tm)

        rows_p = _round_up(n_rows, tm)
        if rows_p != n_rows:
            x2d_f = jnp.pad(x2d, ((0, rows_p - n_rows), (0, 0)))
        else:
            x2d_f = x2d

        operands = [x2d_f]
        for w, b in zip(weights_p, biases_p):
            operands.extend([w, b])

        flops = 2 * rows_p * (d_in_p * d_h_p + n_hidden * d_h_p * d_h_p + d_h_p * d_out_p)
        transc = (rows_p * d_h_p * (n_hidden + 1)
                  if act in ("gelu", "gelu_tanh", "silu", "sigmoid") else 0)
        bytes_acc = (int(x2d_f.size) * comp_dt.itemsize
                     + rows_p * d_out_p * jnp.dtype(out_dtype).itemsize
                     + resident_bytes // 2)

        def call_fused(single_buffer_weights):
            in_specs = [pl.BlockSpec((tm, d_in_p), lambda i: (i, 0))]
            for op in operands[1:]:
                if single_buffer_weights:
                    # Constant block index -> keep a single VMEM copy resident.
                    spec = pl.BlockSpec(op.shape, lambda i: (0, 0),
                                        pipeline_mode=pl.Buffered(1))
                else:
                    spec = pl.BlockSpec(op.shape, lambda i: (0, 0))
                in_specs.append(spec)
            return pl.pallas_call(
                functools.partial(_mlp_fused_kernel, n_hidden, act),
                out_shape=jax.ShapeDtypeStruct((rows_p, d_out_p), out_dtype),
                grid=(rows_p // tm,),
                in_specs=in_specs,
                out_specs=pl.BlockSpec((tm, d_out_p), lambda i: (i, 0)),
                compiler_params=pltpu.CompilerParams(
                    dimension_semantics=("parallel",),
                    vmem_limit_bytes=int(vmem_limit_bytes)),
                cost_estimate=pl.CostEstimate(
                    flops=flops, transcendentals=transc, bytes_accessed=bytes_acc),
            )(*operands)

        try:
            out2d = call_fused(True)
        except Exception:
            # Runtime rejected single-buffered specs; budget already assumed
            # double-buffered weights, so the default pipelining is safe.
            out2d = call_fused(False)

        return out2d[:n_rows, :d_out].reshape(B, S, d_out)

    # --- layer-wise fallback: weights too large to stay VMEM-resident ---
    h = x2d
    n_layers = len(weights_p)
    for li, (w, b) in enumerate(zip(weights_p, biases_p)):
        is_last = li == n_layers - 1
        h = _linear_pallas(
            h, w, b,
            act=None if is_last else act,
            out_dtype=out_dtype if is_last else comp_dt,
            vmem_budget_bytes=vmem_budget_bytes,
            vmem_limit_bytes=vmem_limit_bytes)
    return h[:n_rows, :d_out].reshape(B, S, d_out)


# ------------- deterministic parameter init (mirrors the PyTorch module) -------------

def xavier_uniform(key, fan_in, fan_out):
    bound = math.sqrt(6.0 / (fan_in + fan_out))
    return jax.random.uniform(key, (fan_in, fan_out), jnp.float32, -bound, bound)


def kaiming_uniform_relu(key, fan_in, fan_out):
    # torch kaiming_uniform_ with nonlinearity='relu': bound = sqrt(2) * sqrt(3 / fan_in)
    bound = math.sqrt(2.0) * math.sqrt(3.0 / fan_in)
    return jax.random.uniform(key, (fan_in, fan_out), jnp.float32, -bound, bound)


def init_mlp_params(key, d_in, d_out, d_hidden, hidden_layers, zeros=False):
    keys = jax.random.split(key, 2 + hidden_layers)
    params = {}
    params["in"] = (xavier_uniform(keys[0], d_in, d_hidden),
                    jnp.zeros((1, d_hidden), jnp.float32))
    params["hidden"] = [
        (kaiming_uniform_relu(keys[1 + i], d_hidden, d_hidden),
         jnp.zeros((1, d_hidden), jnp.float32))
        for i in range(hidden_layers)
    ]
    if zeros:
        w_out = jnp.zeros((d_hidden, d_out), jnp.float32)
    else:
        w_out = xavier_uniform(keys[1 + hidden_layers], d_hidden, d_out)
    params["out"] = (w_out, jnp.zeros((1, d_out), jnp.float32))
    return params


if __name__ == "__main__":
    # Small shapes consistent with the module's forward: x [B, S, d_in]
    B, S = 2, 8
    d_in, d_hidden, d_out = 32, 64, 32
    hidden_layers = 1

    key = jax.random.PRNGKey(0)
    kx, kp = jax.random.split(key)
    x = jax.random.normal(kx, (B, S, d_in), jnp.float32)
    params = init_mlp_params(kp, d_in, d_out, d_hidden, hidden_layers, zeros=False)

    # plain-JAX reference (torch-default exact erf GELU)
    def ref(x):
        h = x.reshape(-1, d_in)
        w, b = params["in"]
        h = jax.nn.gelu(h @ w + b, approximate=False)
        for w_h, b_h in params["hidden"]:
            h = jax.nn.gelu(h @ w_h + b_h, approximate=False)
        w, b = params["out"]
        return (h @ w + b).reshape(B, S, d_out)

    expected = ref(x)

    # 1) fused path, f32 MXU operands -> exact parity with the torch module
    out_f32 = jax.block_until_ready(
        mlp_forward(x, params, act="gelu", compute_dtype=jnp.float32))
    assert out_f32.shape == (B, S, d_out)
    assert jnp.allclose(out_f32, expected, atol=1e-5, rtol=1e-5)

    # 2) fused path, default bf16 MXU operands (fast path)
    out_bf16 = jax.block_until_ready(mlp_forward(x, params, act="gelu"))
    assert out_bf16.shape == (B, S, d_out)
    assert jnp.allclose(out_bf16, expected, atol=5e-2, rtol=5e-2)

    # 3) layer-wise fallback path (used when weights can't stay VMEM-resident)
    out_lw = jax.block_until_ready(
        mlp_forward(x, params, act="gelu", compute_dtype=jnp.float32,
                    force_layerwise=True))
    assert jnp.allclose(out_lw, expected, atol=1e-5, rtol=1e-5)

    print("KERNEL_OK")
</pallas_src>

<mosaic_0001>
module attributes {stable_mosaic.version = 11 : i64} {
  func.func @_mlp_fused_kernel(%arg0: i32, %arg1: memref<8x128xf32, #tpu.memory_space<vmem>>, %arg2: memref<128x128xf32, #tpu.memory_space<vmem>>, %arg3: memref<1x128xf32, #tpu.memory_space<vmem>>, %arg4: memref<128x128xf32, #tpu.memory_space<vmem>>, %arg5: memref<1x128xf32, #tpu.memory_space<vmem>>, %arg6: memref<128x128xf32, #tpu.memory_space<vmem>>, %arg7: memref<1x128xf32, #tpu.memory_space<vmem>>, %arg8: memref<8x128xf32, #tpu.memory_space<vmem>>) attributes {dimension_semantics = [#tpu.dimension_semantics<parallel>], iteration_bounds = array<i64: 2>, scalar_prefetch = 0 : i64, scratch_operands = 0 : i64, tpu.core_type = #tpu.core_type<tc>, window_params = [{transform_indices = @transform_0, window_bounds = array<i64: 8, 128>}, {pipeline_mode = #tpu.pipeline_mode<synchronous>, transform_indices = @transform_1, window_bounds = array<i64: 128, 128>}, {pipeline_mode = #tpu.pipeline_mode<synchronous>, transform_indices = @transform_2, window_bounds = array<i64: 1, 128>}, {pipeline_mode = #tpu.pipeline_mode<synchronous>, transform_indices = @transform_3, window_bounds = array<i64: 128, 128>}, {pipeline_mode = #tpu.pipeline_mode<synchronous>, transform_indices = @transform_4, window_bounds = array<i64: 1, 128>}, {pipeline_mode = #tpu.pipeline_mode<synchronous>, transform_indices = @transform_5, window_bounds = array<i64: 128, 128>}, {pipeline_mode = #tpu.pipeline_mode<synchronous>, transform_indices = @transform_6, window_bounds = array<i64: 1, 128>}, {transform_indices = @transform_7, window_bounds = array<i64: 8, 128>}]} {
    %c0 = arith.constant 0 : index
    %c0_0 = arith.constant 0 : index
    %0 = vector.load %arg1[%c0, %c0_0] : memref<8x128xf32, #tpu.memory_space<vmem>>, vector<8x128xf32>
    %c0_1 = arith.constant 0 : index
    %c0_2 = arith.constant 0 : index
    %1 = vector.load %arg2[%c0_1, %c0_2] : memref<128x128xf32, #tpu.memory_space<vmem>>, vector<128x128xf32>
    %cst = arith.constant dense<0.000000e+00> : vector<8x128xf32>
    %2 = tpu.matmul %0, %1, %cst {dimension_numbers = #tpu.dot_dimension_numbers<[1], [0], [0], [1], [0, 0, 1, 1], [], []>} : vector<8x128xf32>, vector<128x128xf32>, vector<8x128xf32> -> vector<8x128xf32>
    %c0_3 = arith.constant 0 : index
    %c0_4 = arith.constant 0 : index
    %3 = vector.load %arg3[%c0_3, %c0_4] : memref<1x128xf32, #tpu.memory_space<vmem>>, vector<1x128xf32>
    %4 = vector.broadcast %3 : vector<1x128xf32> to vector<8x128xf32>
    %5 = arith.addf %2, %4 : vector<8x128xf32>
    %cst_5 = arith.constant 5.000000e-01 : f32
    %6 = vector.broadcast %cst_5 : f32 to vector<8x128xf32>
    %7 = arith.mulf %6, %5 : vector<8x128xf32>
    %cst_6 = arith.constant 0.707106769 : f32
    %8 = vector.broadcast %cst_6 : f32 to vector<8x128xf32>
    %9 = arith.mulf %5, %8 : vector<8x128xf32>
    %10 = math.erf %9 : vector<8x128xf32>
    %cst_7 = arith.constant 1.000000e+00 : f32
    %11 = vector.broadcast %cst_7 : f32 to vector<8x128xf32>
    %12 = arith.addf %11, %10 : vector<8x128xf32>
    %13 = arith.mulf %7, %12 : vector<8x128xf32>
    %c0_8 = arith.constant 0 : index
    %c0_9 = arith.constant 0 : index
    %14 = vector.load %arg4[%c0_8, %c0_9] : memref<128x128xf32, #tpu.memory_space<vmem>>, vector<128x128xf32>
    %cst_10 = arith.constant dense<0.000000e+00> : vector<8x128xf32>
    %15 = tpu.matmul %13, %14, %cst_10 {dimension_numbers = #tpu.dot_dimension_numbers<[1], [0], [0], [1], [0, 0, 1, 1], [], []>} : vector<8x128xf32>, vector<128x128xf32>, vector<8x128xf32> -> vector<8x128xf32>
    %c0_11 = arith.constant 0 : index
    %c0_12 = arith.constant 0 : index
    %16 = vector.load %arg5[%c0_11, %c0_12] : memref<1x128xf32, #tpu.memory_space<vmem>>, vector<1x128xf32>
    %17 = vector.broadcast %16 : vector<1x128xf32> to vector<8x128xf32>
    %18 = arith.addf %15, %17 : vector<8x128xf32>
    %cst_13 = arith.constant 5.000000e-01 : f32
    %19 = vector.broadcast %cst_13 : f32 to vector<8x128xf32>
    %20 = arith.mulf %19, %18 : vector<8x128xf32>
    %cst_14 = arith.constant 0.707106769 : f32
    %21 = vector.broadcast %cst_14 : f32 to vector<8x128xf32>
    %22 = arith.mulf %18, %21 : vector<8x128xf32>
    %23 = math.erf %22 : vector<8x128xf32>
    %cst_15 = arith.constant 1.000000e+00 : f32
    %24 = vector.broadcast %cst_15 : f32 to vector<8x128xf32>
    %25 = arith.addf %24, %23 : vector<8x128xf32>
    %26 = arith.mulf %20, %25 : vector<8x128xf32>
    %c0_16 = arith.constant 0 : index
    %c0_17 = arith.constant 0 : index
    %27 = vector.load %arg6[%c0_16, %c0_17] : memref<128x128xf32, #tpu.memory_space<vmem>>, vector<128x128xf32>
    %cst_18 = arith.constant dense<0.000000e+00> : vector<8x128xf32>
    %28 = tpu.matmul %26, %27, %cst_18 {dimension_numbers = #tpu.dot_dimension_numbers<[1], [0], [0], [1], [0, 0, 1, 1], [], []>} : vector<8x128xf32>, vector<128x128xf32>, vector<8x128xf32> -> vector<8x128xf32>
    %c0_19 = arith.constant 0 : index
    %c0_20 = arith.constant 0 : index
    %29 = vector.load %arg7[%c0_19, %c0_20] : memref<1x128xf32, #tpu.memory_space<vmem>>, vector<1x128xf32>
    %30 = vector.broadcast %29 : vector<1x128xf32> to vector<8x128xf32>
    %31 = arith.addf %28, %30 : vector<8x128xf32>
    %c0_21 = arith.constant 0 : index
    %c0_22 = arith.constant 0 : index
    %32 = vector.load %arg8[%c0_21, %c0_22] : memref<8x128xf32, #tpu.memory_space<vmem>>, vector<8x128xf32>
    tpu.vector_store %arg8[%c0_21, %c0_22], %31 {strides = array<i32>} : memref<8x128xf32, #tpu.memory_space<vmem>>, vector<8x128xf32>,
    return
  }
  func.func @transform_0(%arg0: i32) -> (i32, i32) {
    %c0_i32 = arith.constant 0 : i32
    %c0_i32_0 = arith.constant 0 : i32
    return %arg0, %c0_i32 : i32, i32
  }
  func.func @transform_1(%arg0: i32) -> (i32, i32) {
    %c0_i32 = arith.constant 0 : i32
    %c0_i32_0 = arith.constant 0 : i32
    %c0_i32_1 = arith.constant 0 : i32
    return %c0_i32, %c0_i32_0 : i32, i32
  }
  func.func @transform_2(%arg0: i32) -> (i32, i32) {
    %c0_i32 = arith.constant 0 : i32
    %c0_i32_0 = arith.constant 0 : i32
    %c0_i32_1 = arith.constant 0 : i32
    return %c0_i32, %c0_i32_0 : i32, i32
  }
  func.func @transform_3(%arg0: i32) -> (i32, i32) {
    %c0_i32 = arith.constant 0 : i32
    %c0_i32_0 = arith.constant 0 : i32
    %c0_i32_1 = arith.constant 0 : i32
    return %c0_i32, %c0_i32_0 : i32, i32
  }
  func.func @transform_4(%arg0: i32) -> (i32, i32) {
    %c0_i32 = arith.constant 0 : i32
    %c0_i32_0 = arith.constant 0 : i32
    %c0_i32_1 = arith.constant 0 : i32
    return %c0_i32, %c0_i32_0 : i32, i32
  }
  func.func @transform_5(%arg0: i32) -> (i32, i32) {
    %c0_i32 = arith.constant 0 : i32
    %c0_i32_0 = arith.constant 0 : i32
    %c0_i32_1 = arith.constant 0 : i32
    return %c0_i32, %c0_i32_0 : i32, i32
  }
  func.func @transform_6(%arg0: i32) -> (i32, i32) {
    %c0_i32 = arith.constant 0 : i32
    %c0_i32_0 = arith.constant 0 : i32
    %c0_i32_1 = arith.constant 0 : i32
    return %c0_i32, %c0_i32_0 : i32, i32
  }
  func.func @transform_7(%arg0: i32) -> (i32, i32) {
    %c0_i32 = arith.constant 0 : i32
    %c0_i32_0 = arith.constant 0 : i32
    return %arg0, %c0_i32 : i32, i32
  }
}

module attributes {stable_mosaic.version = 11 : i64} {
  func.func @_mlp_fused_kernel(%arg0: i32, %arg1: memref<8x128xf32, #tpu.memory_space<vmem>>, %arg2: memref<128x128xf32, #tpu.memory_space<vmem>>, %arg3: memref<1x128xf32, #tpu.memory_space<vmem>>, %arg4: memref<128x128xf32, #tpu.memory_space<vmem>>, %arg5: memref<1x128xf32, #tpu.memory_space<vmem>>, %arg6: memref<128x128xf32, #tpu.memory_space<vmem>>, %arg7: memref<1x128xf32, #tpu.memory_space<vmem>>, %arg8: memref<8x128xf32, #tpu.memory_space<vmem>>) attributes {dimension_semantics = [#tpu.dimension_semantics<parallel>], iteration_bounds = array<i64: 2>, scalar_prefetch = 0 : i64, scratch_operands = 0 : i64, tpu.core_type = #tpu.core_type<tc>, window_params = [{transform_indices = @transform_0, window_bounds = array<i64: 8, 128>}, {pipeline_mode = #tpu.pipeline_mode<synchronous>, transform_indices = @transform_1, window_bounds = array<i64: 128, 128>}, {pipeline_mode = #tpu.pipeline_mode<synchronous>, transform_indices = @transform_2, window_bounds = array<i64: 1, 128>}, {pipeline_mode = #tpu.pipeline_mode<synchronous>, transform_indices = @transform_3, window_bounds = array<i64: 128, 128>}, {pipeline_mode = #tpu.pipeline_mode<synchronous>, transform_indices = @transform_4, window_bounds = array<i64: 1, 128>}, {pipeline_mode = #tpu.pipeline_mode<synchronous>, transform_indices = @transform_5, window_bounds = array<i64: 128, 128>}, {pipeline_mode = #tpu.pipeline_mode<synchronous>, transform_indices = @transform_6, window_bounds = array<i64: 1, 128>}, {transform_indices = @transform_7, window_bounds = array<i64: 8, 128>}]} {
    %c0 = arith.constant 0 : index
    %c0_0 = arith.constant 0 : index
    %0 = vector.load %arg1[%c0, %c0_0] : memref<8x128xf32, #tpu.memory_space<vmem>>, vector<8x128xf32>
    %c0_1 = arith.constant 0 : index
    %c0_2 = arith.constant 0 : index
    %1 = vector.load %arg2[%c0_1, %c0_2] : memref<128x128xf32, #tpu.memory_space<vmem>>, vector<128x128xf32>
    %cst = arith.constant dense<0.000000e+00> : vector<8x128xf32>
    %2 = tpu.matmul %0, %1, %cst {dimension_numbers = #tpu.dot_dimension_numbers<[1], [0], [0], [1], [0, 0, 1, 1], [], []>} : vector<8x128xf32>, vector<128x128xf32>, vector<8x128xf32> -> vector<8x128xf32>
    %c0_3 = arith.constant 0 : index
    %c0_4 = arith.constant 0 : index
    %3 = vector.load %arg3[%c0_3, %c0_4] : memref<1x128xf32, #tpu.memory_space<vmem>>, vector<1x128xf32>
    %4 = vector.broadcast %3 : vector<1x128xf32> to vector<8x128xf32>
    %5 = arith.addf %2, %4 : vector<8x128xf32>
    %cst_5 = arith.constant 5.000000e-01 : f32
    %6 = vector.broadcast %cst_5 : f32 to vector<8x128xf32>
    %7 = arith.mulf %6, %5 : vector<8x128xf32>
    %cst_6 = arith.constant 0.707106769 : f32
    %8 = vector.broadcast %cst_6 : f32 to vector<8x128xf32>
    %9 = arith.mulf %5, %8 : vector<8x128xf32>
    %10 = math.erf %9 : vector<8x128xf32>
    %cst_7 = arith.constant 1.000000e+00 : f32
    %11 = vector.broadcast %cst_7 : f32 to vector<8x128xf32>
    %12 = arith.addf %11, %10 : vector<8x128xf32>
    %13 = arith.mulf %7, %12 : vector<8x128xf32>
    %c0_8 = arith.constant 0 : index
    %c0_9 = arith.constant 0 : index
    %14 = vector.load %arg4[%c0_8, %c0_9] : memref<128x128xf32, #tpu.memory_space<vmem>>, vector<128x128xf32>
    %cst_10 = arith.constant dense<0.000000e+00> : vector<8x128xf32>
    %15 = tpu.matmul %13, %14, %cst_10 {dimension_numbers = #tpu.dot_dimension_numbers<[1], [0], [0], [1], [0, 0, 1, 1], [], []>} : vector<8x128xf32>, vector<128x128xf32>, vector<8x128xf32> -> vector<8x128xf32>
    %c0_11 = arith.constant 0 : index
    %c0_12 = arith.constant 0 : index
    %16 = vector.load %arg5[%c0_11, %c0_12] : memref<1x128xf32, #tpu.memory_space<vmem>>, vector<1x128xf32>
    %17 = vector.broadcast %16 : vector<1x128xf32> to vector<8x128xf32>
    %18 = arith.addf %15, %17 : vector<8x128xf32>
    %cst_13 = arith.constant 5.000000e-01 : f32
    %19 = vector.broadcast %cst_13 : f32 to vector<8x128xf32>
    %20 = arith.mulf %19, %18 : vector<8x128xf32>
    %cst_14 = arith.constant 0.707106769 : f32
    %21 = vector.broadcast %cst_14 : f32 to vector<8x128xf32>
    %22 = arith.mulf %18, %21 : vector<8x128xf32>
    %23 = math.erf %22 : vector<8x128xf32>
    %cst_15 = arith.constant 1.000000e+00 : f32
    %24 = vector.broadcast %cst_15 : f32 to vector<8x128xf32>
    %25 = arith.addf %24, %23 : vector<8x128xf32>
    %26 = arith.mulf %20, %25 : vector<8x128xf32>
    %c0_16 = arith.constant 0 : index
    %c0_17 = arith.constant 0 : index
    %27 = vector.load %arg6[%c0_16, %c0_17] : memref<128x128xf32, #tpu.memory_space<vmem>>, vector<128x128xf32>
    %cst_18 = arith.constant dense<0.000000e+00> : vector<8x128xf32>
    %28 = tpu.matmul %26, %27, %cst_18 {dimension_numbers = #tpu.dot_dimension_numbers<[1], [0], [0], [1], [0, 0, 1, 1], [], []>} : vector<8x128xf32>, vector<128x128xf32>, vector<8x128xf32> -> vector<8x128xf32>
    %c0_19 = arith.constant 0 : index
    %c0_20 = arith.constant 0 : index
    %29 = vector.load %arg7[%c0_19, %c0_20] : memref<1x128xf32, #tpu.memory_space<vmem>>, vector<1x128xf32>
    %30 = vector.broadcast %29 : vector<1x128xf32> to vector<8x128xf32>
    %31 = arith.addf %28, %30 : vector<8x128xf32>
    %c0_21 = arith.constant 0 : index
    %c0_22 = arith.constant 0 : index
    %32 = vector.load %arg8[%c0_21, %c0_22] : memref<8x128xf32, #tpu.memory_space<vmem>>, vector<8x128xf32>
    tpu.vector_store %arg8[%c0_21, %c0_22], %31 {strides = array<i32>} : memref<8x128xf32, #tpu.memory_space<vmem>>, vector<8x128xf32>,
    return
  }
  func.func @transform_0(%arg0: i32) -> (i32, i32) {
    %c0_i32 = arith.constant 0 : i32
    %c0_i32_0 = arith.constant 0 : i32
    return %arg0, %c0_i32 : i32, i32
  }
  func.func @transform_1(%arg0: i32) -> (i32, i32) {
    %c0_i32 = arith.constant 0 : i32
    %c0_i32_0 = arith.constant 0 : i32
    %c0_i32_1 = arith.constant 0 : i32
    return %c0_i32, %c0_i32_0 : i32, i32
  }
  func.func @transform_2(%arg0: i32) -> (i32, i32) {
    %c0_i32 = arith.constant 0 : i32
    %c0_i32_0 = arith.constant 0 : i32
    %c0_i32_1 = arith.constant 0 : i32
    return %c0_i32, %c0_i32_0 : i32, i32
  }
  func.func @transform_3(%arg0: i32) -> (i32, i32) {
    %c0_i32 = arith.constant 0 : i32
    %c0_i32_0 = arith.constant 0 : i32
    %c0_i32_1 = arith.constant 0 : i32
    return %c0_i32, %c0_i32_0 : i32, i32
  }
  func.func @transform_4(%arg0: i32) -> (i32, i32) {
    %c0_i32 = arith.constant 0 : i32
    %c0_i32_0 = arith.constant 0 : i32
    %c0_i32_1 = arith.constant 0 : i32
    return %c0_i32, %c0_i32_0 : i32, i32
  }
  func.func @transform_5(%arg0: i32) -> (i32, i32) {
    %c0_i32 = arith.constant 0 : i32
    %c0_i32_0 = arith.constant 0 : i32
    %c0_i32_1 = arith.constant 0 : i32
    return %c0_i32, %c0_i32_0 : i32, i32
  }
  func.func @transform_6(%arg0: i32) -> (i32, i32) {
    %c0_i32 = arith.constant 0 : i32
    %c0_i32_0 = arith.constant 0 : i32
    %c0_i32_1 = arith.constant 0 : i32
    return %c0_i32, %c0_i32_0 : i32, i32
  }
  func.func @transform_7(%arg0: i32) -> (i32, i32) {
    %c0_i32 = arith.constant 0 : i32
    %c0_i32_0 = arith.constant 0 : i32
    return %arg0, %c0_i32 : i32, i32
  }
}

</mosaic_0001>

<llo_original>
// kernel: tpu_custom_call.1
$region0: #{tpu_custom_call.1}
  #allocation0 [shape = 'u32[]', space=smem, size = 0x4, offset = 0x4, fixed_abs, tag = 'smem constant byte address 0x4 - core index']
  #allocation1 [shape = 'u32[72,128]{1,0:T(1,128)}', space=vmem, size = 0x9000, scoped, tag = 'internal scratch']
  %s0 = inlined_call_operand.hbm [shape: f32[16,128], index: 0, kind: input, shape index: {}]
  %s1 = inlined_call_operand.hbm [shape: f32[128,128], index: 1, kind: input, shape index: {}]
  %s2 = inlined_call_operand.vmem [shape: f32[1,128], index: 2, kind: input, shape index: {}]
  %s3 = inlined_call_operand.hbm [shape: f32[128,128], index: 3, kind: input, shape index: {}]
  %s4 = inlined_call_operand.vmem [shape: f32[1,128], index: 4, kind: input, shape index: {}]
  %s5 = inlined_call_operand.hbm [shape: f32[128,128], index: 5, kind: input, shape index: {}]
  %s6 = inlined_call_operand.vmem [shape: f32[1,128], index: 6, kind: input, shape index: {}]
  %s7 = inlined_call_operand.hbm [shape: f32[16,128], index: 7, kind: output, shape index: {}]
  %s8 = sld [smem:[#allocation0]]
  $region77: #{tpu_custom_call.1} parent=0
    _
  %s10 = ssub.s32 1, %s8
  %s11 = scalar_select 0, %s10, %s8
  $region1: #{tpu_custom_call.1} parent=0
    #allocation2 [shape = 'u8[8192]{0}', space=vmem, size = 0x2000, scoped, tag = 'input window, operand 0']
    #allocation3 [shape = 's32[2]{0}', space=sflag, size = 0x8, scoped, tag = 'scoped memory for tpu_custom_call.1']
    #allocation4 [shape = 's32[2]{0}', space=sflag, size = 0x8, scoped, tag = 'scoped memory for tpu_custom_call.1']
    #allocation5 [shape = 'u8[65536]{0}', space=vmem, size = 0x10000, scoped, tag = 'input window, operand 1, single buffered']
    #allocation6 [shape = 's32[1]{0}', space=sflag, size = 0x4, scoped, tag = 'scoped memory for tpu_custom_call.1']
    #allocation7 [shape = 'u8[65536]{0}', space=vmem, size = 0x10000, scoped, tag = 'input window, operand 3, single buffered']
    #allocation8 [shape = 'u8[65536]{0}', space=vmem, size = 0x10000, scoped, tag = 'input window, operand 5, single buffered']
    #allocation9 [shape = 's32[1]{0}', space=sflag, size = 0x4, scoped, tag = 'scoped memory for tpu_custom_call.1']
    #allocation10 [shape = 'u8[8192]{0}', space=vmem, size = 0x2000, scoped, tag = 'output window, operand 0']
    %12 = vsyncpa [#allocation3], 0
    %s13 = scalar_lea.sflag [#allocation3], 1
    %14 = vsyncpa %s13, 0
    %15 = vsyncpa [#allocation6], 0
    %16 = vsyncpa [#allocation9], 0
    %17 = vsyncpa [#allocation4], 0
    %s18 = scalar_lea.sflag [#allocation4], 1
    %19 = vsyncpa %s18, 0
    loop: start=0, step=1, limit=4
    $region2: #{tpu_custom_call.1} parent=1 // loop_pre_header
      _
    $region3: #{tpu_custom_call.1} parent=1 // loop_header
      %s21 = sphi 0, %s25
      %p22 = scmp.ge.s32.totalorder %s21, 4
      %s31 = sphi 0, %s33
      %s34 = sphi 0, %s31
      %s35 = sphi 0, %s34
      %s51 = sphi 0, %s35
      %s55 = sphi 0, %s55
      %s57 = sphi 0, %s55
      %s58 = sphi 0, %s57
      %s72 = sphi 0, %s58
      %s76 = sphi 0, %s76
      %s78 = sphi 0, %s76
      %s79 = sphi 0, %s78
      %s93 = sphi 0, %s79
      %s97 = sphi 0, %s97
      %s99 = sphi 0, %s97
      %s100 = sphi 0, %s99
      %s114 = sphi 0, %s100
      %s118 = sphi 0, %s118
      %s120 = sphi 0, %s118
      %s121 = sphi 0, %s120
      %s135 = sphi 0, %s121
      %s139 = sphi 0, %s139
      %s141 = sphi 0, %s139
      %s142 = sphi 0, %s141
      %s156 = sphi 0, %s142
      %s160 = sphi 0, %s160
      %s162 = sphi 0, %s160
      %s163 = sphi 0, %s162
      %s177 = sphi 0, %s163
      %s183 = sphi 0, %s185
      %s186 = sphi 0, %s183
      %s187 = sphi 0, %s186
      %s203 = sphi 0, %s187
    $region4: #{tpu_custom_call.1} parent=1 // loop_header_branch
      %24 = sbr.rel (%p22) target = $region8
    $region5: #{tpu_custom_call.1} parent=1 // loop_body
      %s26 = ssub.s32 %s21, 1
      %s27 = ssub.s32 %s21, 2
      %s28 = sadd.s32 %s21, 1
      %s29 = ssub.s32 %s21, %s28
      %p30 = scmp.eq.s32.totalorder %s29, 0
      %s32 = sadd.s32 %s31, 1
      %s33 = scalar_select %p30, %s31, %s32
      %p36 = pneg %p30
      %p37 = scmp.eq.s32.totalorder %s21, 1
      %p38 = por %p36, %p37
      %p39 = scmp.ne.s32.totalorder %s31, %s34
      %p40 = scmp.eq.s32.totalorder %s21, 0
      %p41 = por %p39, %p40
      %p42 = scmp.ne.s32.totalorder %s31, %s34
      %p43 = scmp.eq.s32.totalorder %s26, 1
      %p44 = por %p42, %p43
      %p45 = scmp.ne.s32.totalorder %s34, %s35
      %p46 = scmp.eq.s32.totalorder %s26, 0
      %p47 = por %p45, %p46
      %p48 = scmp.ne.s32.totalorder %s34, %s35
      %p49 = scmp.eq.s32.totalorder %s27, 1
      %p50 = por %p48, %p49
      %p52 = scmp.ne.s32.totalorder %s35, %s51
      %p53 = scmp.eq.s32.totalorder %s27, 0
      %p54 = por %p52, %p53
      %s56 = sadd.s32 %s55, 1
      %p59 = scmp.eq.s32.totalorder %s21, 1
      %p60 = scmp.ne.s32.totalorder %s55, %s57
      %p61 = scmp.eq.s32.totalorder %s21, 0
      %p62 = por %p60, %p61
      %p63 = scmp.ne.s32.totalorder %s55, %s57
      %p64 = scmp.eq.s32.totalorder %s26, 1
      %p65 = por %p63, %p64
      %p66 = scmp.ne.s32.totalorder %s57, %s58
      %p67 = scmp.eq.s32.totalorder %s26, 0
      %p68 = por %p66, %p67
      %p69 = scmp.ne.s32.totalorder %s57, %s58
      %p70 = scmp.eq.s32.totalorder %s27, 1
      %p71 = por %p69, %p70
      %p73 = scmp.ne.s32.totalorder %s58, %s72
      %p74 = scmp.eq.s32.totalorder %s27, 0
      %p75 = por %p73, %p74
      %s77 = sadd.s32 %s76, 1
      %p80 = scmp.eq.s32.totalorder %s21, 1
      %p81 = scmp.ne.s32.totalorder %s76, %s78
      %p82 = scmp.eq.s32.totalorder %s21, 0
      %p83 = por %p81, %p82
      %p84 = scmp.ne.s32.totalorder %s76, %s78
      %p85 = scmp.eq.s32.totalorder %s26, 1
      %p86 = por %p84, %p85
      %p87 = scmp.ne.s32.totalorder %s78, %s79
      %p88 = scmp.eq.s32.totalorder %s26, 0
      %p89 = por %p87, %p88
      %p90 = scmp.ne.s32.totalorder %s78, %s79
      %p91 = scmp.eq.s32.totalorder %s27, 1
      %p92 = por %p90, %p91
      %p94 = scmp.ne.s32.totalorder %s79, %s93
      %p95 = scmp.eq.s32.totalorder %s27, 0
      %p96 = por %p94, %p95
      %s98 = sadd.s32 %s97, 1
      %p101 = scmp.eq.s32.totalorder %s21, 1
      %p102 = scmp.ne.s32.totalorder %s97, %s99
      %p103 = scmp.eq.s32.totalorder %s21, 0
      %p104 = por %p102, %p103
      %p105 = scmp.ne.s32.totalorder %s97, %s99
      %p106 = scmp.eq.s32.totalorder %s26, 1
      %p107 = por %p105, %p106
      %p108 = scmp.ne.s32.totalorder %s99, %s100
      %p109 = scmp.eq.s32.totalorder %s26, 0
      %p110 = por %p108, %p109
      %p111 = scmp.ne.s32.totalorder %s99, %s100
      %p112 = scmp.eq.s32.totalorder %s27, 1
      %p113 = por %p111, %p112
      %p115 = scmp.ne.s32.totalorder %s100, %s114
      %p116 = scmp.eq.s32.totalorder %s27, 0
      %p117 = por %p115, %p116
      %s119 = sadd.s32 %s118, 1
      %p122 = scmp.eq.s32.totalorder %s21, 1
      %p123 = scmp.ne.s32.totalorder %s118, %s120
      %p124 = scmp.eq.s32.totalorder %s21, 0
      %p125 = por %p123, %p124
      %p126 = scmp.ne.s32.totalorder %s118, %s120
      %p127 = scmp.eq.s32.totalorder %s26, 1
      %p128 = por %p126, %p127
      %p129 = scmp.ne.s32.totalorder %s120, %s121
      %p130 = scmp.eq.s32.totalorder %s26, 0
      %p131 = por %p129, %p130
      %p132 = scmp.ne.s32.totalorder %s120, %s121
      %p133 = scmp.eq.s32.totalorder %s27, 1
      %p134 = por %p132, %p133
      %p136 = scmp.ne.s32.totalorder %s121, %s135
      %p137 = scmp.eq.s32.totalorder %s27, 0
      %p138 = por %p136, %p137
      %s140 = sadd.s32 %s139, 1
      %p143 = scmp.eq.s32.totalorder %s21, 1
      %p144 = scmp.ne.s32.totalorder %s139, %s141
      %p145 = scmp.eq.s32.totalorder %s21, 0
      %p146 = por %p144, %p145
      %p147 = scmp.ne.s32.totalorder %s139, %s141
      %p148 = scmp.eq.s32.totalorder %s26, 1
      %p149 = por %p147, %p148
      %p150 = scmp.ne.s32.totalorder %s141, %s142
      %p151 = scmp.eq.s32.totalorder %s26, 0
      %p152 = por %p150, %p151
      %p153 = scmp.ne.s32.totalorder %s141, %s142
      %p154 = scmp.eq.s32.totalorder %s27, 1
      %p155 = por %p153, %p154
      %p157 = scmp.ne.s32.totalorder %s142, %s156
      %p158 = scmp.eq.s32.totalorder %s27, 0
      %p159 = por %p157, %p158
      %s161 = sadd.s32 %s160, 1
      %p164 = scmp.eq.s32.totalorder %s21, 1
      %p165 = scmp.ne.s32.totalorder %s160, %s162
      %p166 = scmp.eq.s32.totalorder %s21, 0
      %p167 = por %p165, %p166
      %p168 = scmp.ne.s32.totalorder %s160, %s162
      %p169 = scmp.eq.s32.totalorder %s26, 1
      %p170 = por %p168, %p169
      %p171 = scmp.ne.s32.totalorder %s162, %s163
      %p172 = scmp.eq.s32.totalorder %s26, 0
      %p173 = por %p171, %p172
      %p174 = scmp.ne.s32.totalorder %s162, %s163
      %p175 = scmp.eq.s32.totalorder %s27, 1
      %p176 = por %p174, %p175
      %p178 = scmp.ne.s32.totalorder %s163, %s177
      %p179 = scmp.eq.s32.totalorder %s27, 0
      %p180 = por %p178, %p179
      %s181 = ssub.s32 %s21, %s28
      %p182 = scmp.eq.s32.totalorder %s181, 0
      %s184 = sadd.s32 %s183, 1
      %s185 = scalar_select %p182, %s183, %s184
      %p188 = pneg %p182
      %p189 = scmp.eq.s32.totalorder %s21, 1
      %p190 = por %p188, %p189
      %p191 = scmp.ne.s32.totalorder %s183, %s186
      %p192 = scmp.eq.s32.totalorder %s21, 0
      %p193 = por %p191, %p192
      %p194 = scmp.ne.s32.totalorder %s183, %s186
      %p195 = scmp.eq.s32.totalorder %s26, 1
      %p196 = por %p194, %p195
      %p197 = scmp.ne.s32.totalorder %s186, %s187
      %p198 = scmp.eq.s32.totalorder %s26, 0
      %p199 = por %p197, %p198
      %p200 = scmp.ne.s32.totalorder %s186, %s187
      %p201 = scmp.eq.s32.totalorder %s27, 1
      %p202 = por %p200, %p201
      %p204 = scmp.ne.s32.totalorder %s187, %s203
      %p205 = scmp.eq.s32.totalorder %s27, 0
      %p206 = por %p204, %p205
      %p207 = scmp.le.s32.totalorder 1, %s21
      %p208 = scmp.lt.s32.totalorder %s21, 3
      %p209 = pnand %p207, %p208
      %p210 = pneg %p209
      // Predicated region
      $region9: #{tpu_custom_call.1} parent=5 // pred_check
        _
      $region10: #{tpu_custom_call.1} parent=5 // pred_check_branch
        %212 = sbr.rel (%p209) target = $region12
      $region11: #{tpu_custom_call.1} parent=5 // pred_region
        %s213 = ssub.s32 %s21, 1
        // Predicated region
        $region13: #{tpu_custom_call.1} parent=11 // pred_check
          %p214 = pneg %p68
        $region14: #{tpu_custom_call.1} parent=11 // pred_check_branch
          %216 = sbr.rel (%p214) target = $region16
        $region15: #{tpu_custom_call.1} parent=11 // pred_region
          %218 = vsyncadd [#allocation6], 0
          %s219 = sshll.u32 %s1, 4
          %s220 = int_to_ptr.hbm [resolvable:$true] %s219
          %s221 = sshll.u32 [#allocation5], 4
          %s222 = int_to_ptr.vmem [resolvable:$true] %s221
          %227 = dma.hbm_to_vmem [thread:$0]  %s220, 2048, %s222, [#allocation6], 128, 128, 8
        $region16: #{tpu_custom_call.1} parent=11 // pred_fallthru
          _
        // Predicated region
        $region17: #{tpu_custom_call.1} parent=11 // pred_check
          %p228 = pneg %p89
        $region18: #{tpu_custom_call.1} parent=11 // pred_check_branch
          %230 = sbr.rel (%p228) target = $region20
        $region19: #{tpu_custom_call.1} parent=11 // pred_region
          _
        $region20: #{tpu_custom_call.1} parent=11 // pred_fallthru
          _
        // Predicated region
        $region21: #{tpu_custom_call.1} parent=11 // pred_check
          %p231 = pneg %p110
        $region22: #{tpu_custom_call.1} parent=11 // pred_check_branch
          %233 = sbr.rel (%p231) target = $region24
        $region23: #{tpu_custom_call.1} parent=11 // pred_region
          %235 = vsyncadd [#allocation6], 0
          %s236 = sshll.u32 %s3, 4
          %s237 = int_to_ptr.hbm [resolvable:$true] %s236
          %s238 = sshll.u32 [#allocation7], 4
          %s239 = int_to_ptr.vmem [resolvable:$true] %s238
          %244 = dma.hbm_to_vmem [thread:$0]  %s237, 2048, %s239, [#allocation6], 128, 128, 8
        $region24: #{tpu_custom_call.1} parent=11 // pred_fallthru
          _
        // Predicated region
        $region25: #{tpu_custom_call.1} parent=11 // pred_check
          %p245 = pneg %p131
        $region26: #{tpu_custom_call.1} parent=11 // pred_check_branch
          %247 = sbr.rel (%p245) target = $region28
        $region27: #{tpu_custom_call.1} parent=11 // pred_region
          _
        $region28: #{tpu_custom_call.1} parent=11 // pred_fallthru
          _
        // Predicated region
        $region29: #{tpu_custom_call.1} parent=11 // pred_check
          %p248 = pneg %p152
        $region30: #{tpu_custom_call.1} parent=11 // pred_check_branch
          %250 = sbr.rel (%p248) target = $region32
        $region31: #{tpu_custom_call.1} parent=11 // pred_region
          %252 = vsyncadd [#allocation9], 0
          %s253 = sshll.u32 %s5, 4
          %s254 = int_to_ptr.hbm [resolvable:$true] %s253
          %s255 = sshll.u32 [#allocation8], 4
          %s256 = int_to_ptr.vmem [resolvable:$true] %s255
          %261 = dma.hbm_to_vmem [thread:$0]  %s254, 2048, %s256, [#allocation9], 128, 128, 8
        $region32: #{tpu_custom_call.1} parent=11 // pred_fallthru
          _
        // Predicated region
        $region33: #{tpu_custom_call.1} parent=11 // pred_check
          %p262 = pneg %p173
        $region34: #{tpu_custom_call.1} parent=11 // pred_check_branch
          %264 = sbr.rel (%p262) target = $region36
        $region35: #{tpu_custom_call.1} parent=11 // pred_region
          _
        $region36: #{tpu_custom_call.1} parent=11 // pred_fallthru
          _
      $region12: #{tpu_custom_call.1} parent=5 // pred_fallthru
        _
      %p265 = scmp.lt.s32.totalorder %s21, 2
      // Predicated region
      $region37: #{tpu_custom_call.1} parent=5 // pred_check
        %p266 = pneg %p265
      $region38: #{tpu_custom_call.1} parent=5 // pred_check_branch
        %268 = sbr.rel (%p266) target = $region40
      $region39: #{tpu_custom_call.1} parent=5 // pred_region
        // Predicated region
        $region41: #{tpu_custom_call.1} parent=39 // pred_check
          %p269 = pneg %p41
        $region42: #{tpu_custom_call.1} parent=39 // pred_check_branch
          %271 = sbr.rel (%p269) target = $region44
        $region43: #{tpu_custom_call.1} parent=39 // pred_region
          %s272 = sand.u32 %s31, 1
          %s273 = scalar_lea.sflag [#allocation3], %s272
          %s274 = sand.u32 %s31, 1
          %s275 = smul.addr %s274, 8
          %s276 = scalar_lea.vmem [#allocation2], %s275
          %278 = vsyncadd %s273, 0
          %s279 = smul.addr %s21, 8
          %s280 = scalar_lea.hbm %s0, %s279
          %s282 = sshll.u32 %s280, 4
          %s283 = int_to_ptr.hbm [resolvable:$true] %s282
          %s284 = sshll.u32 %s276, 4
          %s285 = int_to_ptr.vmem [resolvable:$true] %s284
          %287 = dma.hbm_to_vmem [thread:$0]  %s283, 128, %s285, %s273
        $region44: #{tpu_custom_call.1} parent=39 // pred_fallthru
          _
      $region40: #{tpu_custom_call.1} parent=5 // pred_fallthru
        _
      %p288 = scmp.le.s32.totalorder 1, %s21
      %p289 = scmp.lt.s32.totalorder %s21, 3
      %p290 = pnand %p288, %p289
      %p291 = pneg %p290
      // Predicated region
      $region45: #{tpu_custom_call.1} parent=5 // pred_check
        _
      $region46: #{tpu_custom_call.1} parent=5 // pred_check_branch
        %293 = sbr.rel (%p290) target = $region48
      $region47: #{tpu_custom_call.1} parent=5 // pred_region
        %s294 = ssub.s32 %s21, 1
        %s295 = sand.u32 %s34, 1
        %s296 = scalar_lea.sflag [#allocation3], %s295
        %s297 = sand.u32 %s34, 1
        %s298 = smul.addr %s297, 8
        %s299 = scalar_lea.vmem [#allocation2], %s298
        // Predicated region
        $region49: #{tpu_custom_call.1} parent=47 // pred_check
          %p300 = pneg %p47
        $region50: #{tpu_custom_call.1} parent=47 // pred_check_branch
          %302 = sbr.rel (%p300) target = $region52
        $region51: #{tpu_custom_call.1} parent=47 // pred_region
          %304 = dma.done %s296, 128
        $region52: #{tpu_custom_call.1} parent=47 // pred_fallthru
          _
        // Predicated region
        $region53: #{tpu_custom_call.1} parent=47 // pred_check
          %p305 = pneg %p68
        $region54: #{tpu_custom_call.1} parent=47 // pred_check_branch
          %307 = sbr.rel (%p305) target = $region56
        $region55: #{tpu_custom_call.1} parent=47 // pred_region
          %309 = dma.done [#allocation6], 2048
        $region56: #{tpu_custom_call.1} parent=47 // pred_fallthru
          _
        // Predicated region
        $region57: #{tpu_custom_call.1} parent=47 // pred_check
          %p310 = pneg %p110
        $region58: #{tpu_custom_call.1} parent=47 // pred_check_branch
          %312 = sbr.rel (%p310) target = $region60
        $region59: #{tpu_custom_call.1} parent=47 // pred_region
          %314 = dma.done [#allocation6], 2048
        $region60: #{tpu_custom_call.1} parent=47 // pred_fallthru
          _
        // Predicated region
        $region61: #{tpu_custom_call.1} parent=47 // pred_check
          %p315 = pneg %p152
        $region62: #{tpu_custom_call.1} parent=47 // pred_check_branch
          %317 = sbr.rel (%p315) target = $region64
        $region63: #{tpu_custom_call.1} parent=47 // pred_region
          %319 = dma.done [#allocation9], 2048
        $region64: #{tpu_custom_call.1} parent=47 // pred_fallthru
          _
        %s320 = sand.u32 %s34, 1
        %s321 = scalar_lea.sflag [#allocation3], %s320
        %s322 = sand.u32 %s34, 1
        %s323 = smul.addr %s322, 8
        %s324 = scalar_lea.vmem [#allocation2], %s323
        %p325 = pneg %p47
        %p326 = pneg %p44
        %p327 = pneg %p68
        %p328 = pneg %p65
        %p329 = pneg %p89
        %p330 = pneg %p86
        %p331 = pneg %p110
        %p332 = pneg %p107
        %p333 = pneg %p131
        %p334 = pneg %p128
        %p335 = pneg %p152
        %p336 = pneg %p149
        %p337 = pneg %p173
        %p338 = pneg %p170
        %p339 = pneg %p199
        %p340 = pneg %p196
        %s341 = sand.u32 %s186, 1
        %s342 = scalar_lea.sflag [#allocation4], %s341
        %s343 = sand.u32 %s186, 1
        %s344 = smul.addr %s343, 8
        %s345 = scalar_lea.vmem [#allocation10], %s344
        %v346 = vld [vmem:[%s299] sm:$0xff]
        %v347 = vld [vmem:[#allocation5] sm:$0xff]
        %v348 = vld [vmem:[#allocation5 + $0x8] sm:$0xff]
        %v349 = vld [vmem:[#allocation5 + $0x10] sm:$0xff]
        %v350 = vld [vmem:[#allocation5 + $0x18] sm:$0xff]
        %v351 = vld [vmem:[#allocation5 + $0x20] sm:$0xff]
        %v352 = vld [vmem:[#allocation5 + $0x28] sm:$0xff]
        %v353 = vld [vmem:[#allocation5 + $0x30] sm:$0xff]
        %v354 = vld [vmem:[#allocation5 + $0x38] sm:$0xff]
        %v355 = vld [vmem:[#allocation5 + $0x40] sm:$0xff]
        %v356 = vld [vmem:[#allocation5 + $0x48] sm:$0xff]
        %v357 = vld [vmem:[#allocation5 + $0x50] sm:$0xff]
        %v358 = vld [vmem:[#allocation5 + $0x58] sm:$0xff]
        %v359 = vld [vmem:[#allocation5 + $0x60] sm:$0xff]
        %v360 = vld [vmem:[#allocation5 + $0x68] sm:$0xff]
        %v361 = vld [vmem:[#allocation5 + $0x70] sm:$0xff]
        %v362 = vld [vmem:[#allocation5 + $0x78] sm:$0xff]
        %v363 = vld [vmem:[%s2] sm:$0x1]
        %v365 = vperm.slane %v363, 0
        %367 = vmatpush.msra.mxu0 %v362
        %368 = vmatpush.msra.mxu0 %v361
        %369 = vmatpush.msra.mxu0 %v360
        %370 = vmatpush.msra.mxu0 %v359
        %371 = vmatpush.msra.mxu0 %v358
        %372 = vmatpush.msra.mxu0 %v357
        %373 = vmatpush.msra.mxu0 %v356
        %374 = vmatpush.msra.mxu0 %v355
        %375 = vmatpush.msra.mxu0 %v354
        %376 = vmatpush.msra.mxu0 %v353
        %377 = vmatpush.msra.mxu0 %v352
        %378 = vmatpush.msra.mxu0 %v351
        %379 = vmatpush.msra.mxu0 %v350
        %380 = vmatpush.msra.mxu0 %v349
        %381 = vmatpush.msra.mxu0 %v348
        %382 = vmatpush.msra.mxu0 %v347
        %383 = vmatmul.f32.gmra.mxu0 %v346
        %v384 = vpop.f32.mrf.mxu0
        %v385 = vadd.f32 %v365, %v384
        %386 = vdwg.mxu0
        %v387 = vmul.f32 %v385, 0.5
        %v388 = vmul.f32 %v385, 0.70710677
        %v389 = vmul.f32 %v388, %v388
        %v390 = vmin.f32 16.0, %v389
        %v391 = vmul.f32 %v390, 2.1237322e-06
        %v392 = vadd.f32 %v391, 0.00028619796
        %v393 = vmul.f32 %v390, %v392
        %v394 = vadd.f32 %v393, 0.0036580483
        %v395 = vmul.f32 %v390, %v394
        %v396 = vadd.f32 %v395, 0.05243302
        %v397 = vmul.f32 %v390, %v396
        %v398 = vadd.f32 %v397, 0.18741608
        %v399 = vmul.f32 %v390, %v398
        %v400 = vadd.f32 %v399, 1.1283791
        %v401 = vmul.f32 %v388, %v400
        %v402 = vmul.f32 %v390, 3.8918573e-05
        %v403 = vadd.f32 %v402, 0.001143296
        %v404 = vmul.f32 %v390, %v403
        %v405 = vadd.f32 %v404, 0.014752088
        %v406 = vmul.f32 %v390, %v405
        %v407 = vadd.f32 %v406, 0.112945676
        %v408 = vmul.f32 %v390, %v407
        %v409 = vadd.f32 %v408, 0.4994258
        %v410 = vmul.f32 %v390, %v409
        %v411 = vadd.f32 %v410, 1.0
        %v412 = vrcp.pop %v411
        %v413 = vmul.f32 %v411, %v412
        %v414 = vsub.f32 1.0, %v413
        %v415 = vmul.f32 %v412, %v414
        %v416 = vadd.f32 %v412, %v415
        %vm417 = vweird.f32 %v411
        %vm418 = vweird.f32 %v412
        %vm419 = vmor %vm417, %vm418
        %v420 = vsel %vm419, %v412, %v416
        %v421 = vand.u32 2147483647, %v411
        %vm422 = vcmp.eq.f32.partialorder %v421, 8.507059e+37
        %v423 = vand.u32 %v411, 2147483648
        %v424 = vor.u32 1.1754944e-38, %v423
        %v425 = vsel %vm422, %v424, %v420
        %v426 = vmul.f32 %v401, %v425
        %v427 = vmin.f32 %v426, 1.0
        %v428 = vmax.f32 %v427, -1.0
        %v429 = vadd.f32 %v428, 1.0
        %v430 = vmul.f32 %v387, %v429
        %v431 = vld [vmem:[#allocation7] sm:$0xff]
        %v432 = vld [vmem:[#allocation7 + $0x8] sm:$0xff]
        %v433 = vld [vmem:[#allocation7 + $0x10] sm:$0xff]
        %v434 = vld [vmem:[#allocation7 + $0x18] sm:$0xff]
        %v435 = vld [vmem:[#allocation7 + $0x20] sm:$0xff]
        %v436 = vld [vmem:[#allocation7 + $0x28] sm:$0xff]
        %v437 = vld [vmem:[#allocation7 + $0x30] sm:$0xff]
        %v438 = vld [vmem:[#allocation7 + $0x38] sm:$0xff]
        %v439 = vld [vmem:[#allocation7 + $0x40] sm:$0xff]
        %v440 = vld [vmem:[#allocation7 + $0x48] sm:$0xff]
        %v441 = vld [vmem:[#allocation7 + $0x50] sm:$0xff]
        %v442 = vld [vmem:[#allocation7 + $0x58] sm:$0xff]
        %v443 = vld [vmem:[#allocation7 + $0x60] sm:$0xff]
        %v444 = vld [vmem:[#allocation7 + $0x68] sm:$0xff]
        %v445 = vld [vmem:[#allocation7 + $0x70] sm:$0xff]
        %v446 = vld [vmem:[#allocation7 + $0x78] sm:$0xff]
        %v447 = vld [vmem:[%s4] sm:$0x1]
        %v449 = vperm.slane %v447, 0
        %451 = vmatpush.msra.mxu0 %v446
        %452 = vmatpush.msra.mxu0 %v445
        %453 = vmatpush.msra.mxu0 %v444
        %454 = vmatpush.msra.mxu0 %v443
        %455 = vmatpush.msra.mxu0 %v442
        %456 = vmatpush.msra.mxu0 %v441
        %457 = vmatpush.msra.mxu0 %v440
        %458 = vmatpush.msra.mxu0 %v439
        %459 = vmatpush.msra.mxu0 %v438
        %460 = vmatpush.msra.mxu0 %v437
        %461 = vmatpush.msra.mxu0 %v436
        %462 = vmatpush.msra.mxu0 %v435
        %463 = vmatpush.msra.mxu0 %v434
        %464 = vmatpush.msra.mxu0 %v433
        %465 = vmatpush.msra.mxu0 %v432
        %466 = vmatpush.msra.mxu0 %v431
        %467 = vmatmul.f32.gmra.mxu0 %v430
        %v468 = vpop.f32.mrf.mxu0
        %v469 = vadd.f32 %v449, %v468
        %470 = vdwg.mxu0
        %v471 = vmul.f32 %v469, 0.5
        %v472 = vmul.f32 %v469, 0.70710677
        %v473 = vmul.f32 %v472, %v472
        %v474 = vmin.f32 16.0, %v473
        %v475 = vmul.f32 %v474, 2.1237322e-06
        %v476 = vadd.f32 %v475, 0.00028619796
        %v477 = vmul.f32 %v474, %v476
        %v478 = vadd.f32 %v477, 0.0036580483
        %v479 = vmul.f32 %v474, %v478
        %v480 = vadd.f32 %v479, 0.05243302
        %v481 = vmul.f32 %v474, %v480
        %v482 = vadd.f32 %v481, 0.18741608
        %v483 = vmul.f32 %v474, %v482
        %v484 = vadd.f32 %v483, 1.1283791
        %v485 = vmul.f32 %v472, %v484
        %v486 = vmul.f32 %v474, 3.8918573e-05
        %v487 = vadd.f32 %v486, 0.001143296
        %v488 = vmul.f32 %v474, %v487
        %v489 = vadd.f32 %v488, 0.014752088
        %v490 = vmul.f32 %v474, %v489
        %v491 = vadd.f32 %v490, 0.112945676
        %v492 = vmul.f32 %v474, %v491
        %v493 = vadd.f32 %v492, 0.4994258
        %v494 = vmul.f32 %v474, %v493
        %v495 = vadd.f32 %v494, 1.0
        %v496 = vrcp.pop %v495
        %v497 = vmul.f32 %v495, %v496
        %v498 = vsub.f32 1.0, %v497
        %v499 = vmul.f32 %v496, %v498
        %v500 = vadd.f32 %v496, %v499
        %vm501 = vweird.f32 %v495
        %vm502 = vweird.f32 %v496
        %vm503 = vmor %vm501, %vm502
        %v504 = vsel %vm503, %v496, %v500
        %v505 = vand.u32 2147483647, %v495
        %vm506 = vcmp.eq.f32.partialorder %v505, 8.507059e+37
        %v507 = vand.u32 %v495, 2147483648
        %v508 = vor.u32 1.1754944e-38, %v507
        %v509 = vsel %vm506, %v508, %v504
        %v510 = vmul.f32 %v485, %v509
        %v511 = vmin.f32 %v510, 1.0
        %v512 = vmax.f32 %v511, -1.0
        %v513 = vadd.f32 %v512, 1.0
        %v514 = vmul.f32 %v471, %v513
        %v515 = vld [vmem:[#allocation8] sm:$0xff]
        %v516 = vld [vmem:[#allocation8 + $0x8] sm:$0xff]
        %v517 = vld [vmem:[#allocation8 + $0x10] sm:$0xff]
        %v518 = vld [vmem:[#allocation8 + $0x18] sm:$0xff]
        %v519 = vld [vmem:[#allocation8 + $0x20] sm:$0xff]
        %v520 = vld [vmem:[#allocation8 + $0x28] sm:$0xff]
        %v521 = vld [vmem:[#allocation8 + $0x30] sm:$0xff]
        %v522 = vld [vmem:[#allocation8 + $0x38] sm:$0xff]
        %v523 = vld [vmem:[#allocation8 + $0x40] sm:$0xff]
        %v524 = vld [vmem:[#allocation8 + $0x48] sm:$0xff]
        %v525 = vld [vmem:[#allocation8 + $0x50] sm:$0xff]
        %v526 = vld [vmem:[#allocation8 + $0x58] sm:$0xff]
        %v527 = vld [vmem:[#allocation8 + $0x60] sm:$0xff]
        %v528 = vld [vmem:[#allocation8 + $0x68] sm:$0xff]
        %v529 = vld [vmem:[#allocation8 + $0x70] sm:$0xff]
        %v530 = vld [vmem:[#allocation8 + $0x78] sm:$0xff]
        %v531 = vld [vmem:[%s6] sm:$0x1]
        %v533 = vperm.slane %v531, 0
        %535 = vmatpush.msra.mxu0 %v530
        %536 = vmatpush.msra.mxu0 %v529
        %537 = vmatpush.msra.mxu0 %v528
        %538 = vmatpush.msra.mxu0 %v527
        %539 = vmatpush.msra.mxu0 %v526
        %540 = vmatpush.msra.mxu0 %v525
        %541 = vmatpush.msra.mxu0 %v524
        %542 = vmatpush.msra.mxu0 %v523
        %543 = vmatpush.msra.mxu0 %v522
        %544 = vmatpush.msra.mxu0 %v521
        %545 = vmatpush.msra.mxu0 %v520
        %546 = vmatpush.msra.mxu0 %v519
        %547 = vmatpush.msra.mxu0 %v518
        %548 = vmatpush.msra.mxu0 %v517
        %549 = vmatpush.msra.mxu0 %v516
        %550 = vmatpush.msra.mxu0 %v515
        %551 = vmatmul.f32.gmra.mxu0 %v514
        %v552 = vpop.f32.mrf.mxu0
        %v553 = vadd.f32 %v533, %v552
        %554 = vdwg.mxu0
        %555 = vst [vmem:[%s345] sm:$0xff] %v553
        %s556 = sand.u32 %s186, 1
        %s557 = scalar_lea.sflag [#allocation4], %s556
        %s558 = sand.u32 %s186, 1
        %s559 = smul.addr %s558, 8
        %s560 = scalar_lea.vmem [#allocation10], %s559
        // Predicated region
        $region65: #{tpu_custom_call.1} parent=47 // pred_check
          %p561 = pneg %p196
        $region66: #{tpu_custom_call.1} parent=47 // pred_check_branch
          %563 = sbr.rel (%p561) target = $region68
        $region67: #{tpu_custom_call.1} parent=47 // pred_region
          %565 = vsyncadd %s557, 0
          %s566 = smul.addr %s26, 8
          %s567 = scalar_lea.hbm %s7, %s566
          %s569 = sshll.u32 %s560, 4
          %s570 = int_to_ptr.vmem [resolvable:$true] %s569
          %s571 = sshll.u32 %s567, 4
          %s572 = int_to_ptr.hbm [resolvable:$true] %s571
          %574 = dma.vmem_to_hbm [thread:$0]  %s570, 128, %s572, %s557
        $region68: #{tpu_custom_call.1} parent=47 // pred_fallthru
          _
      $region48: #{tpu_custom_call.1} parent=5 // pred_fallthru
        _
      %p575 = scmp.le.s32.totalorder 2, %s21
      // Predicated region
      $region69: #{tpu_custom_call.1} parent=5 // pred_check
        %p576 = pneg %p575
      $region70: #{tpu_custom_call.1} parent=5 // pred_check_branch
        %578 = sbr.rel (%p576) target = $region72
      $region71: #{tpu_custom_call.1} parent=5 // pred_region
        %s579 = ssub.s32 %s21, 2
        // Predicated region
        $region73: #{tpu_custom_call.1} parent=71 // pred_check
          %p580 = pneg %p202
        $region74: #{tpu_custom_call.1} parent=71 // pred_check_branch
          %582 = sbr.rel (%p580) target = $region76
        $region75: #{tpu_custom_call.1} parent=71 // pred_region
          %s583 = sand.u32 %s187, 1
          %s584 = scalar_lea.sflag [#allocation4], %s583
          %s585 = sand.u32 %s187, 1
          %s586 = smul.addr %s585, 8
          %s587 = scalar_lea.vmem [#allocation10], %s586
          %589 = dma.done %s584, 128
        $region76: #{tpu_custom_call.1} parent=71 // pred_fallthru
          _
      $region72: #{tpu_custom_call.1} parent=5 // pred_fallthru
        _
    $region6: #{tpu_custom_call.1} parent=1 // loop_footer
      %s25 = sadd.s32 1, %s21
    $region7: #{tpu_custom_call.1} parent=1 // loop_footer_branch
      %20 = sbr.rel target = $region3
    $region8: #{tpu_custom_call.1} parent=1 // loop_exit
      _
    %590 = vsyncpa [#allocation3], 1
    %s591 = scalar_lea.sflag [#allocation3], 1
    %592 = vsyncpa %s591, 1
    %593 = vsyncpa [#allocation6], 1
    %594 = vsyncpa [#allocation9], 1
    %595 = vsyncpa [#allocation4], 1
    %s596 = scalar_lea.sflag [#allocation4], 1
    %597 = vsyncpa %s596, 1

// kernel: tpu_custom_call.1
$region0: #{tpu_custom_call.1}
  #allocation0 [shape = 'u32[]', space=smem, size = 0x4, offset = 0x4, fixed_abs, tag = 'smem constant byte address 0x4 - core index']
  #allocation1 [shape = 'u32[72,128]{1,0:T(1,128)}', space=vmem, size = 0x9000, scoped, tag = 'internal scratch']
  %s0 = inlined_call_operand.hbm [shape: f32[16,128], index: 0, kind: input, shape index: {}]
  %s1 = inlined_call_operand.hbm [shape: f32[128,128], index: 1, kind: input, shape index: {}]
  %s2 = inlined_call_operand.vmem [shape: f32[1,128], index: 2, kind: input, shape index: {}]
  %s3 = inlined_call_operand.hbm [shape: f32[128,128], index: 3, kind: input, shape index: {}]
  %s4 = inlined_call_operand.vmem [shape: f32[1,128], index: 4, kind: input, shape index: {}]
  %s5 = inlined_call_operand.hbm [shape: f32[128,128], index: 5, kind: input, shape index: {}]
  %s6 = inlined_call_operand.vmem [shape: f32[1,128], index: 6, kind: input, shape index: {}]
  %s7 = inlined_call_operand.hbm [shape: f32[16,128], index: 7, kind: output, shape index: {}]
  %s8 = sld [smem:[#allocation0]]
  $region77: #{tpu_custom_call.1} parent=0
    _
  %s10 = ssub.s32 1, %s8
  %s11 = scalar_select 0, %s10, %s8
  $region1: #{tpu_custom_call.1} parent=0
    #allocation2 [shape = 'u8[8192]{0}', space=vmem, size = 0x2000, scoped, tag = 'input window, operand 0']
    #allocation3 [shape = 's32[2]{0}', space=sflag, size = 0x8, scoped, tag = 'scoped memory for tpu_custom_call.1']
    #allocation4 [shape = 's32[2]{0}', space=sflag, size = 0x8, scoped, tag = 'scoped memory for tpu_custom_call.1']
    #allocation5 [shape = 'u8[65536]{0}', space=vmem, size = 0x10000, scoped, tag = 'input window, operand 1, single buffered']
    #allocation6 [shape = 's32[1]{0}', space=sflag, size = 0x4, scoped, tag = 'scoped memory for tpu_custom_call.1']
    #allocation7 [shape = 'u8[65536]{0}', space=vmem, size = 0x10000, scoped, tag = 'input window, operand 3, single buffered']
    #allocation8 [shape = 'u8[65536]{0}', space=vmem, size = 0x10000, scoped, tag = 'input window, operand 5, single buffered']
    #allocation9 [shape = 's32[1]{0}', space=sflag, size = 0x4, scoped, tag = 'scoped memory for tpu_custom_call.1']
    #allocation10 [shape = 'u8[8192]{0}', space=vmem, size = 0x2000, scoped, tag = 'output window, operand 0']
    %12 = vsyncpa [#allocation3], 0
    %s13 = scalar_lea.sflag [#allocation3], 1
    %14 = vsyncpa %s13, 0
    %15 = vsyncpa [#allocation6], 0
    %16 = vsyncpa [#allocation9], 0
    %17 = vsyncpa [#allocation4], 0
    %s18 = scalar_lea.sflag [#allocation4], 1
    %19 = vsyncpa %s18, 0
    loop: start=0, step=1, limit=4
    $region2: #{tpu_custom_call.1} parent=1 // loop_pre_header
      _
    $region3: #{tpu_custom_call.1} parent=1 // loop_header
      %s21 = sphi 0, %s25
      %p22 = scmp.ge.s32.totalorder %s21, 4
      %s31 = sphi 0, %s33
      %s34 = sphi 0, %s31
      %s35 = sphi 0, %s34
      %s51 = sphi 0, %s35
      %s55 = sphi 0, %s55
      %s57 = sphi 0, %s55
      %s58 = sphi 0, %s57
      %s72 = sphi 0, %s58
      %s76 = sphi 0, %s76
      %s78 = sphi 0, %s76
      %s79 = sphi 0, %s78
      %s93 = sphi 0, %s79
      %s97 = sphi 0, %s97
      %s99 = sphi 0, %s97
      %s100 = sphi 0, %s99
      %s114 = sphi 0, %s100
      %s118 = sphi 0, %s118
      %s120 = sphi 0, %s118
      %s121 = sphi 0, %s120
      %s135 = sphi 0, %s121
      %s139 = sphi 0, %s139
      %s141 = sphi 0, %s139
      %s142 = sphi 0, %s141
      %s156 = sphi 0, %s142
      %s160 = sphi 0, %s160
      %s162 = sphi 0, %s160
      %s163 = sphi 0, %s162
      %s177 = sphi 0, %s163
      %s183 = sphi 0, %s185
      %s186 = sphi 0, %s183
      %s187 = sphi 0, %s186
      %s203 = sphi 0, %s187
    $region4: #{tpu_custom_call.1} parent=1 // loop_header_branch
      %24 = sbr.rel (%p22) target = $region8
    $region5: #{tpu_custom_call.1} parent=1 // loop_body
      %s26 = ssub.s32 %s21, 1
      %s27 = ssub.s32 %s21, 2
      %s28 = sadd.s32 %s21, 1
      %s29 = ssub.s32 %s21, %s28
      %p30 = scmp.eq.s32.totalorder %s29, 0
      %s32 = sadd.s32 %s31, 1
      %s33 = scalar_select %p30, %s31, %s32
      %p36 = pneg %p30
      %p37 = scmp.eq.s32.totalorder %s21, 1
      %p38 = por %p36, %p37
      %p39 = scmp.ne.s32.totalorder %s31, %s34
      %p40 = scmp.eq.s32.totalorder %s21, 0
      %p41 = por %p39, %p40
      %p42 = scmp.ne.s32.totalorder %s31, %s34
      %p43 = scmp.eq.s32.totalorder %s26, 1
      %p44 = por %p42, %p43
      %p45 = scmp.ne.s32.totalorder %s34, %s35
      %p46 = scmp.eq.s32.totalorder %s26, 0
      %p47 = por %p45, %p46
      %p48 = scmp.ne.s32.totalorder %s34, %s35
      %p49 = scmp.eq.s32.totalorder %s27, 1
      %p50 = por %p48, %p49
      %p52 = scmp.ne.s32.totalorder %s35, %s51
      %p53 = scmp.eq.s32.totalorder %s27, 0
      %p54 = por %p52, %p53
      %s56 = sadd.s32 %s55, 1
      %p59 = scmp.eq.s32.totalorder %s21, 1
      %p60 = scmp.ne.s32.totalorder %s55, %s57
      %p61 = scmp.eq.s32.totalorder %s21, 0
      %p62 = por %p60, %p61
      %p63 = scmp.ne.s32.totalorder %s55, %s57
      %p64 = scmp.eq.s32.totalorder %s26, 1
      %p65 = por %p63, %p64
      %p66 = scmp.ne.s32.totalorder %s57, %s58
      %p67 = scmp.eq.s32.totalorder %s26, 0
      %p68 = por %p66, %p67
      %p69 = scmp.ne.s32.totalorder %s57, %s58
      %p70 = scmp.eq.s32.totalorder %s27, 1
      %p71 = por %p69, %p70
      %p73 = scmp.ne.s32.totalorder %s58, %s72
      %p74 = scmp.eq.s32.totalorder %s27, 0
      %p75 = por %p73, %p74
      %s77 = sadd.s32 %s76, 1
      %p80 = scmp.eq.s32.totalorder %s21, 1
      %p81 = scmp.ne.s32.totalorder %s76, %s78
      %p82 = scmp.eq.s32.totalorder %s21, 0
      %p83 = por %p81, %p82
      %p84 = scmp.ne.s32.totalorder %s76, %s78
      %p85 = scmp.eq.s32.totalorder %s26, 1
      %p86 = por %p84, %p85
      %p87 = scmp.ne.s32.totalorder %s78, %s79
      %p88 = scmp.eq.s32.totalorder %s26, 0
      %p89 = por %p87, %p88
      %p90 = scmp.ne.s32.totalorder %s78, %s79
      %p91 = scmp.eq.s32.totalorder %s27, 1
      %p92 = por %p90, %p91
      %p94 = scmp.ne.s32.totalorder %s79, %s93
      %p95 = scmp.eq.s32.totalorder %s27, 0
      %p96 = por %p94, %p95
      %s98 = sadd.s32 %s97, 1
      %p101 = scmp.eq.s32.totalorder %s21, 1
      %p102 = scmp.ne.s32.totalorder %s97, %s99
      %p103 = scmp.eq.s32.totalorder %s21, 0
      %p104 = por %p102, %p103
      %p105 = scmp.ne.s32.totalorder %s97, %s99
      %p106 = scmp.eq.s32.totalorder %s26, 1
      %p107 = por %p105, %p106
      %p108 = scmp.ne.s32.totalorder %s99, %s100
      %p109 = scmp.eq.s32.totalorder %s26, 0
      %p110 = por %p108, %p109
      %p111 = scmp.ne.s32.totalorder %s99, %s100
      %p112 = scmp.eq.s32.totalorder %s27, 1
      %p113 = por %p111, %p112
      %p115 = scmp.ne.s32.totalorder %s100, %s114
      %p116 = scmp.eq.s32.totalorder %s27, 0
      %p117 = por %p115, %p116
      %s119 = sadd.s32 %s118, 1
      %p122 = scmp.eq.s32.totalorder %s21, 1
      %p123 = scmp.ne.s32.totalorder %s118, %s120
      %p124 = scmp.eq.s32.totalorder %s21, 0
      %p125 = por %p123, %p124
      %p126 = scmp.ne.s32.totalorder %s118, %s120
      %p127 = scmp.eq.s32.totalorder %s26, 1
      %p128 = por %p126, %p127
      %p129 = scmp.ne.s32.totalorder %s120, %s121
      %p130 = scmp.eq.s32.totalorder %s26, 0
      %p131 = por %p129, %p130
      %p132 = scmp.ne.s32.totalorder %s120, %s121
      %p133 = scmp.eq.s32.totalorder %s27, 1
      %p134 = por %p132, %p133
      %p136 = scmp.ne.s32.totalorder %s121, %s135
      %p137 = scmp.eq.s32.totalorder %s27, 0
      %p138 = por %p136, %p137
      %s140 = sadd.s32 %s139, 1
      %p143 = scmp.eq.s32.totalorder %s21, 1
      %p144 = scmp.ne.s32.totalorder %s139, %s141
      %p145 = scmp.eq.s32.totalorder %s21, 0
      %p146 = por %p144, %p145
      %p147 = scmp.ne.s32.totalorder %s139, %s141
      %p148 = scmp.eq.s32.totalorder %s26, 1
      %p149 = por %p147, %p148
      %p150 = scmp.ne.s32.totalorder %s141, %s142
      %p151 = scmp.eq.s32.totalorder %s26, 0
      %p152 = por %p150, %p151
      %p153 = scmp.ne.s32.totalorder %s141, %s142
      %p154 = scmp.eq.s32.totalorder %s27, 1
      %p155 = por %p153, %p154
      %p157 = scmp.ne.s32.totalorder %s142, %s156
      %p158 = scmp.eq.s32.totalorder %s27, 0
      %p159 = por %p157, %p158
      %s161 = sadd.s32 %s160, 1
      %p164 = scmp.eq.s32.totalorder %s21, 1
      %p165 = scmp.ne.s32.totalorder %s160, %s162
      %p166 = scmp.eq.s32.totalorder %s21, 0
      %p167 = por %p165, %p166
      %p168 = scmp.ne.s32.totalorder %s160, %s162
      %p169 = scmp.eq.s32.totalorder %s26, 1
      %p170 = por %p168, %p169
      %p171 = scmp.ne.s32.totalorder %s162, %s163
      %p172 = scmp.eq.s32.totalorder %s26, 0
      %p173 = por %p171, %p172
      %p174 = scmp.ne.s32.totalorder %s162, %s163
      %p175 = scmp.eq.s32.totalorder %s27, 1
      %p176 = por %p174, %p175
      %p178 = scmp.ne.s32.totalorder %s163, %s177
      %p179 = scmp.eq.s32.totalorder %s27, 0
      %p180 = por %p178, %p179
      %s181 = ssub.s32 %s21, %s28
      %p182 = scmp.eq.s32.totalorder %s181, 0
      %s184 = sadd.s32 %s183, 1
      %s185 = scalar_select %p182, %s183, %s184
      %p188 = pneg %p182
      %p189 = scmp.eq.s32.totalorder %s21, 1
      %p190 = por %p188, %p189
      %p191 = scmp.ne.s32.totalorder %s183, %s186
      %p192 = scmp.eq.s32.totalorder %s21, 0
      %p193 = por %p191, %p192
      %p194 = scmp.ne.s32.totalorder %s183, %s186
      %p195 = scmp.eq.s32.totalorder %s26, 1
      %p196 = por %p194, %p195
      %p197 = scmp.ne.s32.totalorder %s186, %s187
      %p198 = scmp.eq.s32.totalorder %s26, 0
      %p199 = por %p197, %p198
      %p200 = scmp.ne.s32.totalorder %s186, %s187
      %p201 = scmp.eq.s32.totalorder %s27, 1
      %p202 = por %p200, %p201
      %p204 = scmp.ne.s32.totalorder %s187, %s203
      %p205 = scmp.eq.s32.totalorder %s27, 0
      %p206 = por %p204, %p205
      %p207 = scmp.le.s32.totalorder 1, %s21
      %p208 = scmp.lt.s32.totalorder %s21, 3
      %p209 = pnand %p207, %p208
      %p210 = pneg %p209
      // Predicated region
      $region9: #{tpu_custom_call.1} parent=5 // pred_check
        _
      $region10: #{tpu_custom_call.1} parent=5 // pred_check_branch
        %212 = sbr.rel (%p209) target = $region12
      $region11: #{tpu_custom_call.1} parent=5 // pred_region
        %s213 = ssub.s32 %s21, 1
        // Predicated region
        $region13: #{tpu_custom_call.1} parent=11 // pred_check
          %p214 = pneg %p68
        $region14: #{tpu_custom_call.1} parent=11 // pred_check_branch
          %216 = sbr.rel (%p214) target = $region16
        $region15: #{tpu_custom_call.1} parent=11 // pred_region
          %218 = vsyncadd [#allocation6], 0
          %s219 = sshll.u32 %s1, 4
          %s220 = int_to_ptr.hbm [resolvable:$true] %s219
          %s221 = sshll.u32 [#allocation5], 4
          %s222 = int_to_ptr.vmem [resolvable:$true] %s221
          %227 = dma.hbm_to_vmem [thread:$0]  %s220, 2048, %s222, [#allocation6], 128, 128, 8
        $region16: #{tpu_custom_call.1} parent=11 // pred_fallthru
          _
        // Predicated region
        $region17: #{tpu_custom_call.1} parent=11 // pred_check
          %p228 = pneg %p89
        $region18: #{tpu_custom_call.1} parent=11 // pred_check_branch
          %230 = sbr.rel (%p228) target = $region20
        $region19: #{tpu_custom_call.1} parent=11 // pred_region
          _
        $region20: #{tpu_custom_call.1} parent=11 // pred_fallthru
          _
        // Predicated region
        $region21: #{tpu_custom_call.1} parent=11 // pred_check
          %p231 = pneg %p110
        $region22: #{tpu_custom_call.1} parent=11 // pred_check_branch
          %233 = sbr.rel (%p231) target = $region24
        $region23: #{tpu_custom_call.1} parent=11 // pred_region
          %235 = vsyncadd [#allocation6], 0
          %s236 = sshll.u32 %s3, 4
          %s237 = int_to_ptr.hbm [resolvable:$true] %s236
          %s238 = sshll.u32 [#allocation7], 4
          %s239 = int_to_ptr.vmem [resolvable:$true] %s238
          %244 = dma.hbm_to_vmem [thread:$0]  %s237, 2048, %s239, [#allocation6], 128, 128, 8
        $region24: #{tpu_custom_call.1} parent=11 // pred_fallthru
          _
        // Predicated region
        $region25: #{tpu_custom_call.1} parent=11 // pred_check
          %p245 = pneg %p131
        $region26: #{tpu_custom_call.1} parent=11 // pred_check_branch
          %247 = sbr.rel (%p245) target = $region28
        $region27: #{tpu_custom_call.1} parent=11 // pred_region
          _
        $region28: #{tpu_custom_call.1} parent=11 // pred_fallthru
          _
        // Predicated region
        $region29: #{tpu_custom_call.1} parent=11 // pred_check
          %p248 = pneg %p152
        $region30: #{tpu_custom_call.1} parent=11 // pred_check_branch
          %250 = sbr.rel (%p248) target = $region32
        $region31: #{tpu_custom_call.1} parent=11 // pred_region
          %252 = vsyncadd [#allocation9], 0
          %s253 = sshll.u32 %s5, 4
          %s254 = int_to_ptr.hbm [resolvable:$true] %s253
          %s255 = sshll.u32 [#allocation8], 4
          %s256 = int_to_ptr.vmem [resolvable:$true] %s255
          %261 = dma.hbm_to_vmem [thread:$0]  %s254, 2048, %s256, [#allocation9], 128, 128, 8
        $region32: #{tpu_custom_call.1} parent=11 // pred_fallthru
          _
        // Predicated region
        $region33: #{tpu_custom_call.1} parent=11 // pred_check
          %p262 = pneg %p173
        $region34: #{tpu_custom_call.1} parent=11 // pred_check_branch
          %264 = sbr.rel (%p262) target = $region36
        $region35: #{tpu_custom_call.1} parent=11 // pred_region
          _
        $region36: #{tpu_custom_call.1} parent=11 // pred_fallthru
          _
      $region12: #{tpu_custom_call.1} parent=5 // pred_fallthru
        _
      %p265 = scmp.lt.s32.totalorder %s21, 2
      // Predicated region
      $region37: #{tpu_custom_call.1} parent=5 // pred_check
        %p266 = pneg %p265
      $region38: #{tpu_custom_call.1} parent=5 // pred_check_branch
        %268 = sbr.rel (%p266) target = $region40
      $region39: #{tpu_custom_call.1} parent=5 // pred_region
        // Predicated region
        $region41: #{tpu_custom_call.1} parent=39 // pred_check
          %p269 = pneg %p41
        $region42: #{tpu_custom_call.1} parent=39 // pred_check_branch
          %271 = sbr.rel (%p269) target = $region44
        $region43: #{tpu_custom_call.1} parent=39 // pred_region
          %s272 = sand.u32 %s31, 1
          %s273 = scalar_lea.sflag [#allocation3], %s272
          %s274 = sand.u32 %s31, 1
          %s275 = smul.addr %s274, 8
          %s276 = scalar_lea.vmem [#allocation2], %s275
          %278 = vsyncadd %s273, 0
          %s279 = smul.addr %s21, 8
          %s280 = scalar_lea.hbm %s0, %s279
          %s282 = sshll.u32 %s280, 4
          %s283 = int_to_ptr.hbm [resolvable:$true] %s282
          %s284 = sshll.u32 %s276, 4
          %s285 = int_to_ptr.vmem [resolvable:$true] %s284
          %287 = dma.hbm_to_vmem [thread:$0]  %s283, 128, %s285, %s273
        $region44: #{tpu_custom_call.1} parent=39 // pred_fallthru
          _
      $region40: #{tpu_custom_call.1} parent=5 // pred_fallthru
        _
      %p288 = scmp.le.s32.totalorder 1, %s21
      %p289 = scmp.lt.s32.totalorder %s21, 3
      %p290 = pnand %p288, %p289
      %p291 = pneg %p290
      // Predicated region
      $region45: #{tpu_custom_call.1} parent=5 // pred_check
        _
      $region46: #{tpu_custom_call.1} parent=5 // pred_check_branch
        %293 = sbr.rel (%p290) target = $region48
      $region47: #{tpu_custom_call.1} parent=5 // pred_region
        %s294 = ssub.s32 %s21, 1
        %s295 = sand.u32 %s34, 1
        %s296 = scalar_lea.sflag [#allocation3], %s295
        %s297 = sand.u32 %s34, 1
        %s298 = smul.addr %s297, 8
        %s299 = scalar_lea.vmem [#allocation2], %s298
        // Predicated region
        $region49: #{tpu_custom_call.1} parent=47 // pred_check
          %p300 = pneg %p47
        $region50: #{tpu_custom_call.1} parent=47 // pred_check_branch
          %302 = sbr.rel (%p300) target = $region52
        $region51: #{tpu_custom_call.1} parent=47 // pred_region
          %304 = dma.done %s296, 128
        $region52: #{tpu_custom_call.1} parent=47 // pred_fallthru
          _
        // Predicated region
        $region53: #{tpu_custom_call.1} parent=47 // pred_check
          %p305 = pneg %p68
        $region54: #{tpu_custom_call.1} parent=47 // pred_check_branch
          %307 = sbr.rel (%p305) target = $region56
        $region55: #{tpu_custom_call.1} parent=47 // pred_region
          %309 = dma.done [#allocation6], 2048
        $region56: #{tpu_custom_call.1} parent=47 // pred_fallthru
          _
        // Predicated region
        $region57: #{tpu_custom_call.1} parent=47 // pred_check
          %p310 = pneg %p110
        $region58: #{tpu_custom_call.1} parent=47 // pred_check_branch
          %312 = sbr.rel (%p310) target = $region60
        $region59: #{tpu_custom_call.1} parent=47 // pred_region
          %314 = dma.done [#allocation6], 2048
        $region60: #{tpu_custom_call.1} parent=47 // pred_fallthru
          _
        // Predicated region
        $region61: #{tpu_custom_call.1} parent=47 // pred_check
          %p315 = pneg %p152
        $region62: #{tpu_custom_call.1} parent=47 // pred_check_branch
          %317 = sbr.rel (%p315) target = $region64
        $region63: #{tpu_custom_call.1} parent=47 // pred_region
          %319 = dma.done [#allocation9], 2048
        $region64: #{tpu_custom_call.1} parent=47 // pred_fallthru
          _
        %s320 = sand.u32 %s34, 1
        %s321 = scalar_lea.sflag [#allocation3], %s320
        %s322 = sand.u32 %s34, 1
        %s323 = smul.addr %s322, 8
        %s324 = scalar_lea.vmem [#allocation2], %s323
        %p325 = pneg %p47
        %p326 = pneg %p44
        %p327 = pneg %p68
        %p328 = pneg %p65
        %p329 = pneg %p89
        %p330 = pneg %p86
        %p331 = pneg %p110
        %p332 = pneg %p107
        %p333 = pneg %p131
        %p334 = pneg %p128
        %p335 = pneg %p152
        %p336 = pneg %p149
        %p337 = pneg %p173
        %p338 = pneg %p170
        %p339 = pneg %p199
        %p340 = pneg %p196
        %s341 = sand.u32 %s186, 1
        %s342 = scalar_lea.sflag [#allocation4], %s341
        %s343 = sand.u32 %s186, 1
        %s344 = smul.addr %s343, 8
        %s345 = scalar_lea.vmem [#allocation10], %s344
        %v346 = vld [vmem:[%s299] sm:$0xff]
        %v347 = vld [vmem:[#allocation5] sm:$0xff]
        %v348 = vld [vmem:[#allocation5 + $0x8] sm:$0xff]
        %v349 = vld [vmem:[#allocation5 + $0x10] sm:$0xff]
        %v350 = vld [vmem:[#allocation5 + $0x18] sm:$0xff]
        %v351 = vld [vmem:[#allocation5 + $0x20] sm:$0xff]
        %v352 = vld [vmem:[#allocation5 + $0x28] sm:$0xff]
        %v353 = vld [vmem:[#allocation5 + $0x30] sm:$0xff]
        %v354 = vld [vmem:[#allocation5 + $0x38] sm:$0xff]
        %v355 = vld [vmem:[#allocation5 + $0x40] sm:$0xff]
        %v356 = vld [vmem:[#allocation5 + $0x48] sm:$0xff]
        %v357 = vld [vmem:[#allocation5 + $0x50] sm:$0xff]
        %v358 = vld [vmem:[#allocation5 + $0x58] sm:$0xff]
        %v359 = vld [vmem:[#allocation5 + $0x60] sm:$0xff]
        %v360 = vld [vmem:[#allocation5 + $0x68] sm:$0xff]
        %v361 = vld [vmem:[#allocation5 + $0x70] sm:$0xff]
        %v362 = vld [vmem:[#allocation5 + $0x78] sm:$0xff]
        %v363 = vld [vmem:[%s2] sm:$0x1]
        %v365 = vperm.slane %v363, 0
        %367 = vmatpush.msra.mxu0 %v362
        %368 = vmatpush.msra.mxu0 %v361
        %369 = vmatpush.msra.mxu0 %v360
        %370 = vmatpush.msra.mxu0 %v359
        %371 = vmatpush.msra.mxu0 %v358
        %372 = vmatpush.msra.mxu0 %v357
        %373 = vmatpush.msra.mxu0 %v356
        %374 = vmatpush.msra.mxu0 %v355
        %375 = vmatpush.msra.mxu0 %v354
        %376 = vmatpush.msra.mxu0 %v353
        %377 = vmatpush.msra.mxu0 %v352
        %378 = vmatpush.msra.mxu0 %v351
        %379 = vmatpush.msra.mxu0 %v350
        %380 = vmatpush.msra.mxu0 %v349
        %381 = vmatpush.msra.mxu0 %v348
        %382 = vmatpush.msra.mxu0 %v347
        %383 = vmatmul.f32.gmra.mxu0 %v346
        %v384 = vpop.f32.mrf.mxu0
        %v385 = vadd.f32 %v365, %v384
        %386 = vdwg.mxu0
        %v387 = vmul.f32 %v385, 0.5
        %v388 = vmul.f32 %v385, 0.70710677
        %v389 = vmul.f32 %v388, %v388
        %v390 = vmin.f32 16.0, %v389
        %v391 = vmul.f32 %v390, 2.1237322e-06
        %v392 = vadd.f32 %v391, 0.00028619796
        %v393 = vmul.f32 %v390, %v392
        %v394 = vadd.f32 %v393, 0.0036580483
        %v395 = vmul.f32 %v390, %v394
        %v396 = vadd.f32 %v395, 0.05243302
        %v397 = vmul.f32 %v390, %v396
        %v398 = vadd.f32 %v397, 0.18741608
        %v399 = vmul.f32 %v390, %v398
        %v400 = vadd.f32 %v399, 1.1283791
        %v401 = vmul.f32 %v388, %v400
        %v402 = vmul.f32 %v390, 3.8918573e-05
        %v403 = vadd.f32 %v402, 0.001143296
        %v404 = vmul.f32 %v390, %v403
        %v405 = vadd.f32 %v404, 0.014752088
        %v406 = vmul.f32 %v390, %v405
        %v407 = vadd.f32 %v406, 0.112945676
        %v408 = vmul.f32 %v390, %v407
        %v409 = vadd.f32 %v408, 0.4994258
        %v410 = vmul.f32 %v390, %v409
        %v411 = vadd.f32 %v410, 1.0
        %v412 = vrcp.pop %v411
        %v413 = vmul.f32 %v411, %v412
        %v414 = vsub.f32 1.0, %v413
        %v415 = vmul.f32 %v412, %v414
        %v416 = vadd.f32 %v412, %v415
        %vm417 = vweird.f32 %v411
        %vm418 = vweird.f32 %v412
        %vm419 = vmor %vm417, %vm418
        %v420 = vsel %vm419, %v412, %v416
        %v421 = vand.u32 2147483647, %v411
        %vm422 = vcmp.eq.f32.partialorder %v421, 8.507059e+37
        %v423 = vand.u32 %v411, 2147483648
        %v424 = vor.u32 1.1754944e-38, %v423
        %v425 = vsel %vm422, %v424, %v420
        %v426 = vmul.f32 %v401, %v425
        %v427 = vmin.f32 %v426, 1.0
        %v428 = vmax.f32 %v427, -1.0
        %v429 = vadd.f32 %v428, 1.0
        %v430 = vmul.f32 %v387, %v429
        %v431 = vld [vmem:[#allocation7] sm:$0xff]
        %v432 = vld [vmem:[#allocation7 + $0x8] sm:$0xff]
        %v433 = vld [vmem:[#allocation7 + $0x10] sm:$0xff]
        %v434 = vld [vmem:[#allocation7 + $0x18] sm:$0xff]
        %v435 = vld [vmem:[#allocation7 + $0x20] sm:$0xff]
        %v436 = vld [vmem:[#allocation7 + $0x28] sm:$0xff]
        %v437 = vld [vmem:[#allocation7 + $0x30] sm:$0xff]
        %v438 = vld [vmem:[#allocation7 + $0x38] sm:$0xff]
        %v439 = vld [vmem:[#allocation7 + $0x40] sm:$0xff]
        %v440 = vld [vmem:[#allocation7 + $0x48] sm:$0xff]
        %v441 = vld [vmem:[#allocation7 + $0x50] sm:$0xff]
        %v442 = vld [vmem:[#allocation7 + $0x58] sm:$0xff]
        %v443 = vld [vmem:[#allocation7 + $0x60] sm:$0xff]
        %v444 = vld [vmem:[#allocation7 + $0x68] sm:$0xff]
        %v445 = vld [vmem:[#allocation7 + $0x70] sm:$0xff]
        %v446 = vld [vmem:[#allocation7 + $0x78] sm:$0xff]
        %v447 = vld [vmem:[%s4] sm:$0x1]
        %v449 = vperm.slane %v447, 0
        %451 = vmatpush.msra.mxu0 %v446
        %452 = vmatpush.msra.mxu0 %v445
        %453 = vmatpush.msra.mxu0 %v444
        %454 = vmatpush.msra.mxu0 %v443
        %455 = vmatpush.msra.mxu0 %v442
        %456 = vmatpush.msra.mxu0 %v441
        %457 = vmatpush.msra.mxu0 %v440
        %458 = vmatpush.msra.mxu0 %v439
        %459 = vmatpush.msra.mxu0 %v438
        %460 = vmatpush.msra.mxu0 %v437
        %461 = vmatpush.msra.mxu0 %v436
        %462 = vmatpush.msra.mxu0 %v435
        %463 = vmatpush.msra.mxu0 %v434
        %464 = vmatpush.msra.mxu0 %v433
        %465 = vmatpush.msra.mxu0 %v432
        %466 = vmatpush.msra.mxu0 %v431
        %467 = vmatmul.f32.gmra.mxu0 %v430
        %v468 = vpop.f32.mrf.mxu0
        %v469 = vadd.f32 %v449, %v468
        %470 = vdwg.mxu0
        %v471 = vmul.f32 %v469, 0.5
        %v472 = vmul.f32 %v469, 0.70710677
        %v473 = vmul.f32 %v472, %v472
        %v474 = vmin.f32 16.0, %v473
        %v475 = vmul.f32 %v474, 2.1237322e-06
        %v476 = vadd.f32 %v475, 0.00028619796
        %v477 = vmul.f32 %v474, %v476
        %v478 = vadd.f32 %v477, 0.0036580483
        %v479 = vmul.f32 %v474, %v478
        %v480 = vadd.f32 %v479, 0.05243302
        %v481 = vmul.f32 %v474, %v480
        %v482 = vadd.f32 %v481, 0.18741608
        %v483 = vmul.f32 %v474, %v482
        %v484 = vadd.f32 %v483, 1.1283791
        %v485 = vmul.f32 %v472, %v484
        %v486 = vmul.f32 %v474, 3.8918573e-05
        %v487 = vadd.f32 %v486, 0.001143296
        %v488 = vmul.f32 %v474, %v487
        %v489 = vadd.f32 %v488, 0.014752088
        %v490 = vmul.f32 %v474, %v489
        %v491 = vadd.f32 %v490, 0.112945676
        %v492 = vmul.f32 %v474, %v491
        %v493 = vadd.f32 %v492, 0.4994258
        %v494 = vmul.f32 %v474, %v493
        %v495 = vadd.f32 %v494, 1.0
        %v496 = vrcp.pop %v495
        %v497 = vmul.f32 %v495, %v496
        %v498 = vsub.f32 1.0, %v497
        %v499 = vmul.f32 %v496, %v498
        %v500 = vadd.f32 %v496, %v499
        %vm501 = vweird.f32 %v495
        %vm502 = vweird.f32 %v496
        %vm503 = vmor %vm501, %vm502
        %v504 = vsel %vm503, %v496, %v500
        %v505 = vand.u32 2147483647, %v495
        %vm506 = vcmp.eq.f32.partialorder %v505, 8.507059e+37
        %v507 = vand.u32 %v495, 2147483648
        %v508 = vor.u32 1.1754944e-38, %v507
        %v509 = vsel %vm506, %v508, %v504
        %v510 = vmul.f32 %v485, %v509
        %v511 = vmin.f32 %v510, 1.0
        %v512 = vmax.f32 %v511, -1.0
        %v513 = vadd.f32 %v512, 1.0
        %v514 = vmul.f32 %v471, %v513
        %v515 = vld [vmem:[#allocation8] sm:$0xff]
        %v516 = vld [vmem:[#allocation8 + $0x8] sm:$0xff]
        %v517 = vld [vmem:[#allocation8 + $0x10] sm:$0xff]
        %v518 = vld [vmem:[#allocation8 + $0x18] sm:$0xff]
        %v519 = vld [vmem:[#allocation8 + $0x20] sm:$0xff]
        %v520 = vld [vmem:[#allocation8 + $0x28] sm:$0xff]
        %v521 = vld [vmem:[#allocation8 + $0x30] sm:$0xff]
        %v522 = vld [vmem:[#allocation8 + $0x38] sm:$0xff]
        %v523 = vld [vmem:[#allocation8 + $0x40] sm:$0xff]
        %v524 = vld [vmem:[#allocation8 + $0x48] sm:$0xff]
        %v525 = vld [vmem:[#allocation8 + $0x50] sm:$0xff]
        %v526 = vld [vmem:[#allocation8 + $0x58] sm:$0xff]
        %v527 = vld [vmem:[#allocation8 + $0x60] sm:$0xff]
        %v528 = vld [vmem:[#allocation8 + $0x68] sm:$0xff]
        %v529 = vld [vmem:[#allocation8 + $0x70] sm:$0xff]
        %v530 = vld [vmem:[#allocation8 + $0x78] sm:$0xff]
        %v531 = vld [vmem:[%s6] sm:$0x1]
        %v533 = vperm.slane %v531, 0
        %535 = vmatpush.msra.mxu0 %v530
        %536 = vmatpush.msra.mxu0 %v529
        %537 = vmatpush.msra.mxu0 %v528
        %538 = vmatpush.msra.mxu0 %v527
        %539 = vmatpush.msra.mxu0 %v526
        %540 = vmatpush.msra.mxu0 %v525
        %541 = vmatpush.msra.mxu0 %v524
        %542 = vmatpush.msra.mxu0 %v523
        %543 = vmatpush.msra.mxu0 %v522
        %544 = vmatpush.msra.mxu0 %v521
        %545 = vmatpush.msra.mxu0 %v520
        %546 = vmatpush.msra.mxu0 %v519
        %547 = vmatpush.msra.mxu0 %v518
        %548 = vmatpush.msra.mxu0 %v517
        %549 = vmatpush.msra.mxu0 %v516
        %550 = vmatpush.msra.mxu0 %v515
        %551 = vmatmul.f32.gmra.mxu0 %v514
        %v552 = vpop.f32.mrf.mxu0
        %v553 = vadd.f32 %v533, %v552
        %554 = vdwg.mxu0
        %555 = vst [vmem:[%s345] sm:$0xff] %v553
        %s556 = sand.u32 %s186, 1
        %s557 = scalar_lea.sflag [#allocation4], %s556
        %s558 = sand.u32 %s186, 1
        %s559 = smul.addr %s558, 8
        %s560 = scalar_lea.vmem [#allocation10], %s559
        // Predicated region
        $region65: #{tpu_custom_call.1} parent=47 // pred_check
          %p561 = pneg %p196
        $region66: #{tpu_custom_call.1} parent=47 // pred_check_branch
          %563 = sbr.rel (%p561) target = $region68
        $region67: #{tpu_custom_call.1} parent=47 // pred_region
          %565 = vsyncadd %s557, 0
          %s566 = smul.addr %s26, 8
          %s567 = scalar_lea.hbm %s7, %s566
          %s569 = sshll.u32 %s560, 4
          %s570 = int_to_ptr.vmem [resolvable:$true] %s569
          %s571 = sshll.u32 %s567, 4
          %s572 = int_to_ptr.hbm [resolvable:$true] %s571
          %574 = dma.vmem_to_hbm [thread:$0]  %s570, 128, %s572, %s557
        $region68: #{tpu_custom_call.1} parent=47 // pred_fallthru
          _
      $region48: #{tpu_custom_call.1} parent=5 // pred_fallthru
        _
      %p575 = scmp.le.s32.totalorder 2, %s21
      // Predicated region
      $region69: #{tpu_custom_call.1} parent=5 // pred_check
        %p576 = pneg %p575
      $region70: #{tpu_custom_call.1} parent=5 // pred_check_branch
        %578 = sbr.rel (%p576) target = $region72
      $region71: #{tpu_custom_call.1} parent=5 // pred_region
        %s579 = ssub.s32 %s21, 2
        // Predicated region
        $region73: #{tpu_custom_call.1} parent=71 // pred_check
          %p580 = pneg %p202
        $region74: #{tpu_custom_call.1} parent=71 // pred_check_branch
          %582 = sbr.rel (%p580) target = $region76
        $region75: #{tpu_custom_call.1} parent=71 // pred_region
          %s583 = sand.u32 %s187, 1
          %s584 = scalar_lea.sflag [#allocation4], %s583
          %s585 = sand.u32 %s187, 1
          %s586 = smul.addr %s585, 8
          %s587 = scalar_lea.vmem [#allocation10], %s586
          %589 = dma.done %s584, 128
        $region76: #{tpu_custom_call.1} parent=71 // pred_fallthru
          _
      $region72: #{tpu_custom_call.1} parent=5 // pred_fallthru
        _
    $region6: #{tpu_custom_call.1} parent=1 // loop_footer
      %s25 = sadd.s32 1, %s21
    $region7: #{tpu_custom_call.1} parent=1 // loop_footer_branch
      %20 = sbr.rel target = $region3
    $region8: #{tpu_custom_call.1} parent=1 // loop_exit
      _
    %590 = vsyncpa [#allocation3], 1
    %s591 = scalar_lea.sflag [#allocation3], 1
    %592 = vsyncpa %s591, 1
    %593 = vsyncpa [#allocation6], 1
    %594 = vsyncpa [#allocation9], 1
    %595 = vsyncpa [#allocation4], 1
    %s596 = scalar_lea.sflag [#allocation4], 1
    %597 = vsyncpa %s596, 1

</llo_original>
